<compile_context>
chip_gen: v7x
topology: tpu7x:2x2x1
jax: 0.10.0
libtpu: 0.0.40
codegen_flags: <defaults>
</compile_context>

<pallas_src>
import functools

import jax
import jax.numpy as jnp
import numpy as np
from jax.experimental import pallas as pl
from jax.experimental.pallas import tpu as pltpu


# ----------------------------- Pallas kernel ------------------------------

def _unet_up_kernel(x1_ref, x2_ref, uh_ref, w1_ref, b1_ref, w2_ref, b2_ref,
                    o_ref, p_ref, pm_ref):
    """Fused unetUp forward for a block of Nb batch images.

    x1_ref : (Nb, H, W*C1)        bf16 skip connection, flattened over (w, c)
    x2_ref : (Nb, Hc, Wc*C2)      bf16 coarse input (Hc=H/2, Wc=W/2)
    uh_ref : (H, Hc)              bf16 row-interp matrix (align_corners 2x)
    w1_ref : (3, W*C1+Wc*C2, W*Cout) bf16 banded conv1 weights; the width
                                  interp is folded into the up-branch rows
    b1_ref : (1, W*Cout)          f32 conv1 bias tiled across w
    w2_ref : (3, W*Cout, W*Cout)  bf16 banded conv2 weights
    b2_ref : (1, W*Cout)          f32 conv2 bias tiled across w
    o_ref  : (Nb, H, W*Cout)      lane-dense f32 output slab
    p_ref  : (Nb*Hp, W*C1+Wc*C2)  bf16 scratch, H-padded conv1 input slabs
    pm_ref : (Nb*Hp, W*Cout)      bf16 scratch, H-padded conv1 output slabs
    """
    nb, H, _ = o_ref.shape
    Hp = H + 2
    M = nb * Hp
    c1w = x1_ref.shape[-1]          # W*C1: lane split between the two branches

    # Zero both padded scratches (a few unmasked full-width stores); the
    # interiors are overwritten below, so effectively this only (re)writes the
    # per-block H-padding border rows.  Deliberately not gated on
    # program_id == 0: the grid axis is "parallel" and per-core scratches on a
    # dual-TC part would otherwise never be initialized on the second core.
    p_ref[...] = jnp.zeros_like(p_ref)
    pm_ref[...] = jnp.zeros_like(pm_ref)

    # Stage the conv1 input slab: skip connection into lanes [0, W*C1), the
    # row-interpolated (2x, align_corners) coarse input into lanes
    # [W*C1, W*C1+Wc*C2).  The width interpolation lives in the folded
    # weights, so the upsampled tensor is never materialized.
    for b in range(nb):
        r0 = b * Hp + 1
        p_ref[r0:r0 + H, :c1w] = x1_ref[b]
        r_up = jnp.dot(uh_ref[...], x2_ref[b],
                       preferred_element_type=jnp.float32)
        p_ref[r0:r0 + H, c1w:] = r_up.astype(p_ref.dtype)

    def conv3x3(src_ref, w_ref):
        # One fat (M, K) @ (K, W*Cout) matmul per kh tap over ALL Nb*Hp rows.
        # The banded weights carry the kw taps and the W zero padding; the kh
        # row shift is applied to the f32 result (off the bf16 operand path).
        s = src_ref[...]
        z = [jnp.dot(s, w_ref[kh], preferred_element_type=jnp.float32)
             for kh in range(3)]
        return z[0][0:M - 2] + z[1][1:M - 1] + z[2][2:M]

    # conv1 + bias + ReLU; the intermediate activation stays in VMEM.
    zz1 = conv3x3(p_ref, w1_ref)
    for b in range(nb):
        r0 = b * Hp
        h1 = jnp.maximum(zz1[r0:r0 + H] + b1_ref[...], 0.0)
        pm_ref[r0 + 1:r0 + 1 + H, :] = h1.astype(pm_ref.dtype)

    # conv2 + bias + ReLU, stored lane-dense as (H, W*Cout) per image.
    zz2 = conv3x3(pm_ref, w2_ref)
    for b in range(nb):
        r0 = b * Hp
        o_ref[b] = jnp.maximum(zz2[r0:r0 + H] + b2_ref[...], 0.0
                               ).astype(o_ref.dtype)


# --------------------------- host-side weight prep -------------------------

def _interp_matrix(out_sz, in_sz):
    """1-D interpolation matrix for align_corners=True bilinear resize."""
    m = np.zeros((out_sz, in_sz), np.float32)
    if in_sz == 1 or out_sz == 1:
        m[:, 0] = 1.0
        return m
    scale = (in_sz - 1) / (out_sz - 1)
    for o in range(out_sz):
        src = o * scale
        i0 = int(np.floor(src))
        i1 = min(i0 + 1, in_sz - 1)
        f = src - i0
        m[o, i0] += 1.0 - f
        m[o, i1] += f
    return m


def _banded_conv_weights(w_hwio, W):
    """(3, 3, Cin, Cout) HWIO conv weights -> (3, W*Cin, W*Cout) banded f32.

    For kh tap `t`, rows of an H-padded activation slab P (flattened over
    (w, cin)) satisfy  out[h, w*Cout + o] += (P[h + t, :] @ B[t])[w*Cout + o],
    i.e. the padding=1 3x3 conv accumulated over kw and cin (out-of-range kw
    taps are absent == zero padding in W).
    """
    _, _, cin, cout = w_hwio.shape
    sel = np.zeros((3, W, W), np.float32)   # sel[kw, u, w] = 1 iff u == w+kw-1
    for kw in range(3):
        for w in range(W):
            u = w + kw - 1
            if 0 <= u < W:
                sel[kw, u, w] = 1.0
    banded = jnp.einsum('kuw,hkco->hucwo', jnp.asarray(sel),
                        w_hwio.astype(jnp.float32))
    return banded.reshape(3, W * cin, W * cout)


def prepare_unet_up_params(w1, b1, w2, b2, *, H, W, C1):
    """Build the kernel's constant operands ONCE (outside the jitted forward):
    banded conv weights (width interp folded into conv1's up branch), bf16
    cast, tiled f32 biases, bf16 row-interp matrix."""
    Hc, Wc = H // 2, W // 2
    Cout = w1.shape[-1]
    C2 = w1.shape[2] - C1
    assert C2 > 0, "conv1 in_size must exceed the skip-connection channels"

    # Banded weights for the two conv1 channel groups (skip / upsampled path).
    b1a = _banded_conv_weights(w1[:, :, :C1, :], W)        # (3, W*C1,  W*Cout)
    b1b = _banded_conv_weights(w1[:, :, C1:, :], W)        # (3, W*C2,  W*Cout)

    # Width-interp matrix (align_corners 2x), channel-expanded, FOLDED into
    # the up-branch banded weights: removes one in-kernel matmul and shrinks
    # the up branch from W*C2 to Wc*C2 lanes.
    uw = _interp_matrix(W, Wc)                              # (W, Wc)
    uwe = np.einsum('oi,cd->icod', uw, np.eye(C2, dtype=np.float32))
    uwe = jnp.asarray(uwe.reshape(Wc * C2, W * C2))         # (Wc*C2, W*C2)
    b1b_f = jnp.einsum('uk,hko->huo', uwe, b1b)             # (3, Wc*C2, W*Cout)

    # Single merged conv1 weight: rows [0, W*C1) act on the skip slab, rows
    # [W*C1, W*C1+Wc*C2) on the row-interpolated coarse slab -> one matmul per
    # kh tap instead of two.
    w1c = jnp.concatenate([b1a, b1b_f], axis=1).astype(jnp.bfloat16)
    w2b = _banded_conv_weights(w2, W).astype(jnp.bfloat16)

    uh = jnp.asarray(_interp_matrix(H, Hc)).astype(jnp.bfloat16)   # (H, Hc)
    b1t = jnp.tile(b1.astype(jnp.float32), W).reshape(1, W * Cout)
    b2t = jnp.tile(b2.astype(jnp.float32), W).reshape(1, W * Cout)
    return dict(uh=uh, w1c=w1c, b1t=b1t, w2b=w2b, b2t=b2t)


# ------------------------------ jitted forward -----------------------------

@jax.jit
def _unet_up_forward_nchw(x1_nchw, x2_nchw, uh, w1c, b1t, w2b, b2t):
    """unetUp forward.  NCHW at the PyTorch-compatible boundary; lane-dense
    (rows, W*C) NHWC slabs inside (free row-major reshapes)."""
    x1 = jnp.transpose(x1_nchw, (0, 2, 3, 1))
    x2 = jnp.transpose(x2_nchw, (0, 2, 3, 1))
    N, H, W, C1 = x1.shape
    _, Hc, Wc, C2 = x2.shape
    assert (2 * Hc, 2 * Wc) == (H, W), "inputs2 must be at half resolution"
    Cout = w2b.shape[-1] // W
    kc = W * C1 + Wc * C2                    # merged conv1 contraction width
    assert w1c.shape[1] == kc

    # bf16 MXU feed for the activations (also halves their HBM->VMEM DMA).
    x1_2d = x1.reshape(N, H, W * C1).astype(jnp.bfloat16)
    x2_2d = x2.reshape(N, Hc, Wc * C2).astype(jnp.bfloat16)

    Hp = H + 2
    # Batch-block size: raise the matmul M dimension (Nb*Hp rows) toward ~256
    # so the MXU fill/drain is amortized, keeping Nb a divisor of N.
    # (For large N on dual-TC parts the resulting grid stays >= 2 and the
    # "parallel" batch axis feeds both TensorCores.)
    nb = max(1, min(N, 256 // Hp))
    while N % nb:
        nb -= 1

    out = pl.pallas_call(
        _unet_up_kernel,
        out_shape=jax.ShapeDtypeStruct((N, H, W * Cout), jnp.float32),
        grid_spec=pltpu.PrefetchScalarGridSpec(
            num_scalar_prefetch=0,
            grid=(N // nb,),
            in_specs=[
                pl.BlockSpec((nb, H, W * C1), lambda n: (n, 0, 0)),
                pl.BlockSpec((nb, Hc, Wc * C2), lambda n: (n, 0, 0)),
                pl.BlockSpec((H, Hc), lambda n: (0, 0)),
                pl.BlockSpec((3, kc, W * Cout), lambda n: (0, 0, 0)),
                pl.BlockSpec((1, W * Cout), lambda n: (0, 0)),
                pl.BlockSpec((3, W * Cout, W * Cout), lambda n: (0, 0, 0)),
                pl.BlockSpec((1, W * Cout), lambda n: (0, 0)),
            ],
            out_specs=pl.BlockSpec((nb, H, W * Cout), lambda n: (n, 0, 0)),
            scratch_shapes=[
                pltpu.VMEM((nb * Hp, kc), jnp.bfloat16),        # conv1 input slab
                pltpu.VMEM((nb * Hp, W * Cout), jnp.bfloat16),  # conv1 output slab
            ],
        ),
        compiler_params=pltpu.CompilerParams(
            dimension_semantics=("parallel",),
            vmem_limit_bytes=32 * 1024 * 1024,
        ),
    )(x1_2d, x2_2d, uh, w1c, b1t, w2b, b2t)

    return jnp.transpose(out.reshape(N, H, W, Cout), (0, 3, 1, 2))


class UnetUpPallas:
    """JAX/Pallas port of unetUp(in_size, out_size) with the NCHW interface.
    Kernel operands (banded weights, folded interp, tiled biases) are built
    once per spatial shape and cached, not rebuilt on every call."""

    def __init__(self, in_size, out_size, key):
        k1, k2, k3, k4 = jax.random.split(key, 4)
        s1 = 1.0 / (in_size * 9) ** 0.5
        s2 = 1.0 / (out_size * 9) ** 0.5
        # HWIO conv weights, PyTorch-style uniform init.
        self.w1 = jax.random.uniform(k1, (3, 3, in_size, out_size),
                                     jnp.float32, -s1, s1)
        self.b1 = jax.random.uniform(k2, (out_size,), jnp.float32, -s1, s1)
        self.w2 = jax.random.uniform(k3, (3, 3, out_size, out_size),
                                     jnp.float32, -s2, s2)
        self.b2 = jax.random.uniform(k4, (out_size,), jnp.float32, -s2, s2)
        self._params = {}

    def _prepped(self, H, W, C1):
        key = (H, W, C1)
        if key not in self._params:
            self._params[key] = prepare_unet_up_params(
                self.w1, self.b1, self.w2, self.b2, H=H, W=W, C1=C1)
        return self._params[key]

    def __call__(self, inputs1_nchw, inputs2_nchw):
        _, C1, H, W = inputs1_nchw.shape
        p = self._prepped(H, W, C1)
        return _unet_up_forward_nchw(inputs1_nchw, inputs2_nchw,
                                     p["uh"], p["w1c"], p["b1t"],
                                     p["w2b"], p["b2t"])


# --------------------------- pure-JAX reference ---------------------------

def _reference_upsample_2x(x_nhwc):
    """Gather/lerp bilinear 2x upsample, align_corners=True."""
    N, H, W, C = x_nhwc.shape
    Ho, Wo = 2 * H, 2 * W

    def coords(out_sz, in_sz):
        if in_sz == 1 or out_sz == 1:
            idx = jnp.zeros((out_sz,), jnp.int32)
            return jnp.zeros((out_sz,), x_nhwc.dtype), idx, idx
        src = jnp.arange(out_sz, dtype=jnp.float32) * (in_sz - 1) / (out_sz - 1)
        i0 = jnp.floor(src).astype(jnp.int32)
        i1 = jnp.minimum(i0 + 1, in_sz - 1)
        return (src - i0.astype(jnp.float32)).astype(x_nhwc.dtype), i0, i1

    fh, h0, h1 = coords(Ho, H)
    fw, w0, w1 = coords(Wo, W)
    x_h0, x_h1 = x_nhwc[:, h0], x_nhwc[:, h1]
    fw_b = fw[None, None, :, None]
    top = x_h0[:, :, w0] * (1.0 - fw_b) + x_h0[:, :, w1] * fw_b
    bot = x_h1[:, :, w0] * (1.0 - fw_b) + x_h1[:, :, w1] * fw_b
    fh_b = fh[None, :, None, None]
    return top * (1.0 - fh_b) + bot * fh_b


def _reference_forward(inputs1_nchw, inputs2_nchw, w1, b1, w2, b2):
    x1 = jnp.transpose(inputs1_nchw, (0, 2, 3, 1))
    x2 = jnp.transpose(inputs2_nchw, (0, 2, 3, 1))
    cat = jnp.concatenate([x1, _reference_upsample_2x(x2)], axis=-1)
    dn = ('NHWC', 'HWIO', 'NHWC')
    h = jax.lax.conv_general_dilated(cat, w1, (1, 1), 'SAME',
                                     dimension_numbers=dn)
    h = jnp.maximum(h + b1, 0.0)
    h = jax.lax.conv_general_dilated(h, w2, (1, 1), 'SAME',
                                     dimension_numbers=dn)
    h = jnp.maximum(h + b2, 0.0)
    return jnp.transpose(h, (0, 3, 1, 2))


if __name__ == "__main__":
    key = jax.random.PRNGKey(0)
    k_in1, k_in2, k_params = jax.random.split(key, 3)

    # Small UNet-decoder shapes: inputs1 is the skip connection at full res,
    # inputs2 comes from the coarser level at half res.
    N, C1, H, W = 2, 8, 16, 16
    C2 = 8
    in_size = C1 + C2      # channels after the (implicit) concat
    out_size = 8

    inputs1 = jax.random.normal(k_in1, (N, C1, H, W), jnp.float32)
    inputs2 = jax.random.normal(k_in2, (N, C2, H // 2, W // 2), jnp.float32)

    block = UnetUpPallas(in_size, out_size, k_params)
    out = jax.block_until_ready(block(inputs1, inputs2))

    assert out.shape == (N, out_size, H, W), out.shape
    assert bool(jnp.all(out >= 0.0))          # ReLU output is non-negative

    # Check against the pure-JAX/XLA reference (bf16 MXU feed -> loose tol).
    ref = _reference_forward(inputs1, inputs2,
                             block.w1, block.b1, block.w2, block.b2)
    max_err = float(jnp.max(jnp.abs(out - ref)))
    assert max_err < 0.1, f"max abs error vs reference: {max_err}"

    print("KERNEL_OK")
</pallas_src>

<mosaic_0001>
module attributes {stable_mosaic.version = 11 : i64} {
  func.func @_unet_up_kernel(%arg0: i32, %arg1: memref<2x16x128xbf16, #tpu.memory_space<vmem>>, %arg2: memref<2x8x64xbf16, #tpu.memory_space<vmem>>, %arg3: memref<16x8xbf16, #tpu.memory_space<vmem>>, %arg4: memref<3x192x128xbf16, #tpu.memory_space<vmem>>, %arg5: memref<1x128xf32, #tpu.memory_space<vmem>>, %arg6: memref<3x128x128xbf16, #tpu.memory_space<vmem>>, %arg7: memref<1x128xf32, #tpu.memory_space<vmem>>, %arg8: memref<2x16x128xf32, #tpu.memory_space<vmem>>, %arg9: memref<36x192xbf16, #tpu.memory_space<vmem>>, %arg10: memref<36x128xbf16, #tpu.memory_space<vmem>>) attributes {dimension_semantics = [#tpu.dimension_semantics<parallel>], iteration_bounds = array<i64: 1>, scalar_prefetch = 0 : i64, scratch_operands = 2 : i64, tpu.core_type = #tpu.core_type<tc>, window_params = [{transform_indices = @transform_0, window_bounds = array<i64: 2, 16, 128>}, {transform_indices = @transform_1, window_bounds = array<i64: 2, 8, 64>}, {pipeline_mode = #tpu.pipeline_mode<synchronous>, transform_indices = @transform_2, window_bounds = array<i64: 16, 8>}, {pipeline_mode = #tpu.pipeline_mode<synchronous>, transform_indices = @transform_3, window_bounds = array<i64: 3, 192, 128>}, {pipeline_mode = #tpu.pipeline_mode<synchronous>, transform_indices = @transform_4, window_bounds = array<i64: 1, 128>}, {pipeline_mode = #tpu.pipeline_mode<synchronous>, transform_indices = @transform_5, window_bounds = array<i64: 3, 128, 128>}, {pipeline_mode = #tpu.pipeline_mode<synchronous>, transform_indices = @transform_6, window_bounds = array<i64: 1, 128>}, {transform_indices = @transform_7, window_bounds = array<i64: 2, 16, 128>}]} {
    %cst = arith.constant 0.000000e+00 : bf16
    %0 = vector.broadcast %cst : bf16 to vector<36x192xbf16>
    %c0 = arith.constant 0 : index
    %c0_0 = arith.constant 0 : index
    %1 = vector.load %arg9[%c0, %c0_0] : memref<36x192xbf16, #tpu.memory_space<vmem>>, vector<36x192xbf16>
    tpu.vector_store %arg9[%c0, %c0_0], %0 {strides = array<i32>} : memref<36x192xbf16, #tpu.memory_space<vmem>>, vector<36x192xbf16>,
    %cst_1 = arith.constant 0.000000e+00 : bf16
    %2 = vector.broadcast %cst_1 : bf16 to vector<36x128xbf16>
    %c0_2 = arith.constant 0 : index
    %c0_3 = arith.constant 0 : index
    %3 = vector.load %arg10[%c0_2, %c0_3] : memref<36x128xbf16, #tpu.memory_space<vmem>>, vector<36x128xbf16>
    tpu.vector_store %arg10[%c0_2, %c0_3], %2 {strides = array<i32>} : memref<36x128xbf16, #tpu.memory_space<vmem>>, vector<36x128xbf16>,
    %c0_4 = arith.constant 0 : index
    %c0_5 = arith.constant 0 : index
    %c0_6 = arith.constant 0 : index
    %4 = vector.load %arg1[%c0_4, %c0_5, %c0_6] : memref<2x16x128xbf16, #tpu.memory_space<vmem>>, vector<1x16x128xbf16>
    %5 = vector.shape_cast %4 : vector<1x16x128xbf16> to vector<16x128xbf16>
    %c1 = arith.constant 1 : index
    %c0_7 = arith.constant 0 : index
    %6 = vector.load %arg9[%c1, %c0_7] : memref<36x192xbf16, #tpu.memory_space<vmem>>, vector<16x128xbf16>
    tpu.vector_store %arg9[%c1, %c0_7], %5 {strides = array<i32>} : memref<36x192xbf16, #tpu.memory_space<vmem>>, vector<16x128xbf16>,
    %c0_8 = arith.constant 0 : index
    %c0_9 = arith.constant 0 : index
    %7 = vector.load %arg3[%c0_8, %c0_9] : memref<16x8xbf16, #tpu.memory_space<vmem>>, vector<16x8xbf16>
    %c0_10 = arith.constant 0 : index
    %c0_11 = arith.constant 0 : index
    %c0_12 = arith.constant 0 : index
    %8 = vector.load %arg2[%c0_10, %c0_11, %c0_12] : memref<2x8x64xbf16, #tpu.memory_space<vmem>>, vector<1x8x64xbf16>
    %9 = vector.shape_cast %8 : vector<1x8x64xbf16> to vector<8x64xbf16>
    %cst_13 = arith.constant dense<0.000000e+00> : vector<16x64xf32>
    %10 = tpu.matmul %7, %9, %cst_13 {dimension_numbers = #tpu.dot_dimension_numbers<[1], [0], [0], [1], [0, 0, 1, 1], [], []>} : vector<16x8xbf16>, vector<8x64xbf16>, vector<16x64xf32> -> vector<16x64xf32>
    %11 = arith.truncf %10 : vector<16x64xf32> to vector<16x64xbf16>
    %c1_14 = arith.constant 1 : index
    %c128 = arith.constant 128 : index
    %12 = vector.load %arg9[%c1_14, %c128] : memref<36x192xbf16, #tpu.memory_space<vmem>>, vector<16x64xbf16>
    tpu.vector_store %arg9[%c1_14, %c128], %11 {strides = array<i32>} : memref<36x192xbf16, #tpu.memory_space<vmem>>, vector<16x64xbf16>,
    %c1_15 = arith.constant 1 : index
    %c0_16 = arith.constant 0 : index
    %c0_17 = arith.constant 0 : index
    %13 = vector.load %arg1[%c1_15, %c0_16, %c0_17] : memref<2x16x128xbf16, #tpu.memory_space<vmem>>, vector<1x16x128xbf16>
    %14 = vector.shape_cast %13 : vector<1x16x128xbf16> to vector<16x128xbf16>
    %c19 = arith.constant 19 : index
    %c0_18 = arith.constant 0 : index
    %15 = vector.load %arg9[%c19, %c0_18] : memref<36x192xbf16, #tpu.memory_space<vmem>>, vector<16x128xbf16>
    tpu.vector_store %arg9[%c19, %c0_18], %14 {strides = array<i32>} : memref<36x192xbf16, #tpu.memory_space<vmem>>, vector<16x128xbf16>,
    %c0_19 = arith.constant 0 : index
    %c0_20 = arith.constant 0 : index
    %16 = vector.load %arg3[%c0_19, %c0_20] : memref<16x8xbf16, #tpu.memory_space<vmem>>, vector<16x8xbf16>
    %c1_21 = arith.constant 1 : index
    %c0_22 = arith.constant 0 : index
    %c0_23 = arith.constant 0 : index
    %17 = vector.load %arg2[%c1_21, %c0_22, %c0_23] : memref<2x8x64xbf16, #tpu.memory_space<vmem>>, vector<1x8x64xbf16>
    %18 = vector.shape_cast %17 : vector<1x8x64xbf16> to vector<8x64xbf16>
    %cst_24 = arith.constant dense<0.000000e+00> : vector<16x64xf32>
    %19 = tpu.matmul %16, %18, %cst_24 {dimension_numbers = #tpu.dot_dimension_numbers<[1], [0], [0], [1], [0, 0, 1, 1], [], []>} : vector<16x8xbf16>, vector<8x64xbf16>, vector<16x64xf32> -> vector<16x64xf32>
    %20 = arith.truncf %19 : vector<16x64xf32> to vector<16x64xbf16>
    %c19_25 = arith.constant 19 : index
    %c128_26 = arith.constant 128 : index
    %21 = vector.load %arg9[%c19_25, %c128_26] : memref<36x192xbf16, #tpu.memory_space<vmem>>, vector<16x64xbf16>
    tpu.vector_store %arg9[%c19_25, %c128_26], %20 {strides = array<i32>} : memref<36x192xbf16, #tpu.memory_space<vmem>>, vector<16x64xbf16>,
    %c0_27 = arith.constant 0 : index
    %c0_28 = arith.constant 0 : index
    %22 = vector.load %arg9[%c0_27, %c0_28] : memref<36x192xbf16, #tpu.memory_space<vmem>>, vector<36x192xbf16>
    %c0_29 = arith.constant 0 : index
    %c0_30 = arith.constant 0 : index
    %c0_31 = arith.constant 0 : index
    %23 = vector.load %arg4[%c0_29, %c0_30, %c0_31] : memref<3x192x128xbf16, #tpu.memory_space<vmem>>, vector<1x192x128xbf16>
    %24 = vector.shape_cast %23 : vector<1x192x128xbf16> to vector<192x128xbf16>
    %cst_32 = arith.constant dense<0.000000e+00> : vector<36x128xf32>
    %25 = tpu.matmul %22, %24, %cst_32 {dimension_numbers = #tpu.dot_dimension_numbers<[1], [0], [0], [1], [0, 0, 1, 1], [], []>} : vector<36x192xbf16>, vector<192x128xbf16>, vector<36x128xf32> -> vector<36x128xf32>
    %c1_33 = arith.constant 1 : index
    %c0_34 = arith.constant 0 : index
    %c0_35 = arith.constant 0 : index
    %26 = vector.load %arg4[%c1_33, %c0_34, %c0_35] : memref<3x192x128xbf16, #tpu.memory_space<vmem>>, vector<1x192x128xbf16>
    %27 = vector.shape_cast %26 : vector<1x192x128xbf16> to vector<192x128xbf16>
    %cst_36 = arith.constant dense<0.000000e+00> : vector<36x128xf32>
    %28 = tpu.matmul %22, %27, %cst_36 {dimension_numbers = #tpu.dot_dimension_numbers<[1], [0], [0], [1], [0, 0, 1, 1], [], []>} : vector<36x192xbf16>, vector<192x128xbf16>, vector<36x128xf32> -> vector<36x128xf32>
    %c2 = arith.constant 2 : index
    %c0_37 = arith.constant 0 : index
    %c0_38 = arith.constant 0 : index
    %29 = vector.load %arg4[%c2, %c0_37, %c0_38] : memref<3x192x128xbf16, #tpu.memory_space<vmem>>, vector<1x192x128xbf16>
    %30 = vector.shape_cast %29 : vector<1x192x128xbf16> to vector<192x128xbf16>
    %cst_39 = arith.constant dense<0.000000e+00> : vector<36x128xf32>
    %31 = tpu.matmul %22, %30, %cst_39 {dimension_numbers = #tpu.dot_dimension_numbers<[1], [0], [0], [1], [0, 0, 1, 1], [], []>} : vector<36x192xbf16>, vector<192x128xbf16>, vector<36x128xf32> -> vector<36x128xf32>
    %32 = vector.extract_strided_slice %25 {offsets = [0, 0], sizes = [34, 128], strides = [1, 1]} : vector<36x128xf32> to vector<34x128xf32>
    %33 = vector.extract_strided_slice %28 {offsets = [1, 0], sizes = [34, 128], strides = [1, 1]} : vector<36x128xf32> to vector<34x128xf32>
    %34 = arith.addf %32, %33 : vector<34x128xf32>
    %35 = vector.extract_strided_slice %31 {offsets = [2, 0], sizes = [34, 128], strides = [1, 1]} : vector<36x128xf32> to vector<34x128xf32>
    %36 = arith.addf %34, %35 : vector<34x128xf32>
    %37 = vector.extract_strided_slice %36 {offsets = [0, 0], sizes = [16, 128], strides = [1, 1]} : vector<34x128xf32> to vector<16x128xf32>
    %c0_40 = arith.constant 0 : index
    %c0_41 = arith.constant 0 : index
    %38 = vector.load %arg5[%c0_40, %c0_41] : memref<1x128xf32, #tpu.memory_space<vmem>>, vector<1x128xf32>
    %39 = vector.broadcast %38 : vector<1x128xf32> to vector<16x128xf32>
    %40 = arith.addf %37, %39 : vector<16x128xf32>
    %cst_42 = arith.constant 0.000000e+00 : f32
    %41 = vector.broadcast %cst_42 : f32 to vector<16x128xf32>
    %42 = arith.maximumf %40, %41 : vector<16x128xf32>
    %43 = arith.truncf %42 : vector<16x128xf32> to vector<16x128xbf16>
    %c1_43 = arith.constant 1 : index
    %c0_44 = arith.constant 0 : index
    %44 = vector.load %arg10[%c1_43, %c0_44] : memref<36x128xbf16, #tpu.memory_space<vmem>>, vector<16x128xbf16>
    tpu.vector_store %arg10[%c1_43, %c0_44], %43 {strides = array<i32>} : memref<36x128xbf16, #tpu.memory_space<vmem>>, vector<16x128xbf16>,
    %45 = vector.extract_strided_slice %36 {offsets = [18, 0], sizes = [16, 128], strides = [1, 1]} : vector<34x128xf32> to vector<16x128xf32>
    %c0_45 = arith.constant 0 : index
    %c0_46 = arith.constant 0 : index
    %46 = vector.load %arg5[%c0_45, %c0_46] : memref<1x128xf32, #tpu.memory_space<vmem>>, vector<1x128xf32>
    %47 = vector.broadcast %46 : vector<1x128xf32> to vector<16x128xf32>
    %48 = arith.addf %45, %47 : vector<16x128xf32>
    %cst_47 = arith.constant 0.000000e+00 : f32
    %49 = vector.broadcast %cst_47 : f32 to vector<16x128xf32>
    %50 = arith.maximumf %48, %49 : vector<16x128xf32>
    %51 = arith.truncf %50 : vector<16x128xf32> to vector<16x128xbf16>
    %c19_48 = arith.constant 19 : index
    %c0_49 = arith.constant 0 : index
    %52 = vector.load %arg10[%c19_48, %c0_49] : memref<36x128xbf16, #tpu.memory_space<vmem>>, vector<16x128xbf16>
    tpu.vector_store %arg10[%c19_48, %c0_49], %51 {strides = array<i32>} : memref<36x128xbf16, #tpu.memory_space<vmem>>, vector<16x128xbf16>,
    %c0_50 = arith.constant 0 : index
    %c0_51 = arith.constant 0 : index
    %53 = vector.load %arg10[%c0_50, %c0_51] : memref<36x128xbf16, #tpu.memory_space<vmem>>, vector<36x128xbf16>
    %c0_52 = arith.constant 0 : index
    %c0_53 = arith.constant 0 : index
    %c0_54 = arith.constant 0 : index
    %54 = vector.load %arg6[%c0_52, %c0_53, %c0_54] : memref<3x128x128xbf16, #tpu.memory_space<vmem>>, vector<1x128x128xbf16>
    %55 = vector.shape_cast %54 : vector<1x128x128xbf16> to vector<128x128xbf16>
    %cst_55 = arith.constant dense<0.000000e+00> : vector<36x128xf32>
    %56 = tpu.matmul %53, %55, %cst_55 {dimension_numbers = #tpu.dot_dimension_numbers<[1], [0], [0], [1], [0, 0, 1, 1], [], []>} : vector<36x128xbf16>, vector<128x128xbf16>, vector<36x128xf32> -> vector<36x128xf32>
    %c1_56 = arith.constant 1 : index
    %c0_57 = arith.constant 0 : index
    %c0_58 = arith.constant 0 : index
    %57 = vector.load %arg6[%c1_56, %c0_57, %c0_58] : memref<3x128x128xbf16, #tpu.memory_space<vmem>>, vector<1x128x128xbf16>
    %58 = vector.shape_cast %57 : vector<1x128x128xbf16> to vector<128x128xbf16>
    %cst_59 = arith.constant dense<0.000000e+00> : vector<36x128xf32>
    %59 = tpu.matmul %53, %58, %cst_59 {dimension_numbers = #tpu.dot_dimension_numbers<[1], [0], [0], [1], [0, 0, 1, 1], [], []>} : vector<36x128xbf16>, vector<128x128xbf16>, vector<36x128xf32> -> vector<36x128xf32>
    %c2_60 = arith.constant 2 : index
    %c0_61 = arith.constant 0 : index
    %c0_62 = arith.constant 0 : index
    %60 = vector.load %arg6[%c2_60, %c0_61, %c0_62] : memref<3x128x128xbf16, #tpu.memory_space<vmem>>, vector<1x128x128xbf16>
    %61 = vector.shape_cast %60 : vector<1x128x128xbf16> to vector<128x128xbf16>
    %cst_63 = arith.constant dense<0.000000e+00> : vector<36x128xf32>
    %62 = tpu.matmul %53, %61, %cst_63 {dimension_numbers = #tpu.dot_dimension_numbers<[1], [0], [0], [1], [0, 0, 1, 1], [], []>} : vector<36x128xbf16>, vector<128x128xbf16>, vector<36x128xf32> -> vector<36x128xf32>
    %63 = vector.extract_strided_slice %56 {offsets = [0, 0], sizes = [34, 128], strides = [1, 1]} : vector<36x128xf32> to vector<34x128xf32>
    %64 = vector.extract_strided_slice %59 {offsets = [1, 0], sizes = [34, 128], strides = [1, 1]} : vector<36x128xf32> to vector<34x128xf32>
    %65 = arith.addf %63, %64 : vector<34x128xf32>
    %66 = vector.extract_strided_slice %62 {offsets = [2, 0], sizes = [34, 128], strides = [1, 1]} : vector<36x128xf32> to vector<34x128xf32>
    %67 = arith.addf %65, %66 : vector<34x128xf32>
    %68 = vector.extract_strided_slice %67 {offsets = [0, 0], sizes = [16, 128], strides = [1, 1]} : vector<34x128xf32> to vector<16x128xf32>
    %c0_64 = arith.constant 0 : index
    %c0_65 = arith.constant 0 : index
    %69 = vector.load %arg7[%c0_64, %c0_65] : memref<1x128xf32, #tpu.memory_space<vmem>>, vector<1x128xf32>
    %70 = vector.broadcast %69 : vector<1x128xf32> to vector<16x128xf32>
    %71 = arith.addf %68, %70 : vector<16x128xf32>
    %cst_66 = arith.constant 0.000000e+00 : f32
    %72 = vector.broadcast %cst_66 : f32 to vector<16x128xf32>
    %73 = arith.maximumf %71, %72 : vector<16x128xf32>
    %c0_67 = arith.constant 0 : index
    %c0_68 = arith.constant 0 : index
    %c0_69 = arith.constant 0 : index
    %74 = vector.load %arg8[%c0_67, %c0_68, %c0_69] : memref<2x16x128xf32, #tpu.memory_space<vmem>>, vector<1x16x128xf32>
    %75 = vector.shape_cast %74 : vector<1x16x128xf32> to vector<16x128xf32>
    %76 = vector.shape_cast %73 : vector<16x128xf32> to vector<1x16x128xf32>
    tpu.vector_store %arg8[%c0_67, %c0_68, %c0_69], %76 {strides = array<i32>} : memref<2x16x128xf32, #tpu.memory_space<vmem>>, vector<1x16x128xf32>,
    %77 = vector.extract_strided_slice %67 {offsets = [18, 0], sizes = [16, 128], strides = [1, 1]} : vector<34x128xf32> to vector<16x128xf32>
    %c0_70 = arith.constant 0 : index
    %c0_71 = arith.constant 0 : index
    %78 = vector.load %arg7[%c0_70, %c0_71] : memref<1x128xf32, #tpu.memory_space<vmem>>, vector<1x128xf32>
    %79 = vector.broadcast %78 : vector<1x128xf32> to vector<16x128xf32>
    %80 = arith.addf %77, %79 : vector<16x128xf32>
    %cst_72 = arith.constant 0.000000e+00 : f32
    %81 = vector.broadcast %cst_72 : f32 to vector<16x128xf32>
    %82 = arith.maximumf %80, %81 : vector<16x128xf32>
    %c1_73 = arith.constant 1 : index
    %c0_74 = arith.constant 0 : index
    %c0_75 = arith.constant 0 : index
    %83 = vector.load %arg8[%c1_73, %c0_74, %c0_75] : memref<2x16x128xf32, #tpu.memory_space<vmem>>, vector<1x16x128xf32>
    %84 = vector.shape_cast %83 : vector<1x16x128xf32> to vector<16x128xf32>
    %85 = vector.shape_cast %82 : vector<16x128xf32> to vector<1x16x128xf32>
    tpu.vector_store %arg8[%c1_73, %c0_74, %c0_75], %85 {strides = array<i32>} : memref<2x16x128xf32, #tpu.memory_space<vmem>>, vector<1x16x128xf32>,
    return
  }
  func.func @transform_0(%arg0: i32) -> (i32, i32, i32) {
    %c0_i32 = arith.constant 0 : i32
    %c0_i32_0 = arith.constant 0 : i32
    %c0_i32_1 = arith.constant 0 : i32
    return %arg0, %c0_i32, %c0_i32_0 : i32, i32, i32
  }
  func.func @transform_1(%arg0: i32) -> (i32, i32, i32) {
    %c0_i32 = arith.constant 0 : i32
    %c0_i32_0 = arith.constant 0 : i32
    %c0_i32_1 = arith.constant 0 : i32
    return %arg0, %c0_i32, %c0_i32_0 : i32, i32, i32
  }
  func.func @transform_2(%arg0: i32) -> (i32, i32) {
    %c0_i32 = arith.constant 0 : i32
    %c0_i32_0 = arith.constant 0 : i32
    %c0_i32_1 = arith.constant 0 : i32
    return %c0_i32, %c0_i32_0 : i32, i32
  }
  func.func @transform_3(%arg0: i32) -> (i32, i32, i32) {
    %c0_i32 = arith.constant 0 : i32
    %c0_i32_0 = arith.constant 0 : i32
    %c0_i32_1 = arith.constant 0 : i32
    %c0_i32_2 = arith.constant 0 : i32
    return %c0_i32, %c0_i32_0, %c0_i32_1 : i32, i32, i32
  }
  func.func @transform_4(%arg0: i32) -> (i32, i32) {
    %c0_i32 = arith.constant 0 : i32
    %c0_i32_0 = arith.constant 0 : i32
    %c0_i32_1 = arith.constant 0 : i32
    return %c0_i32, %c0_i32_0 : i32, i32
  }
  func.func @transform_5(%arg0: i32) -> (i32, i32, i32) {
    %c0_i32 = arith.constant 0 : i32
    %c0_i32_0 = arith.constant 0 : i32
    %c0_i32_1 = arith.constant 0 : i32
    %c0_i32_2 = arith.constant 0 : i32
    return %c0_i32, %c0_i32_0, %c0_i32_1 : i32, i32, i32
  }
  func.func @transform_6(%arg0: i32) -> (i32, i32) {
    %c0_i32 = arith.constant 0 : i32
    %c0_i32_0 = arith.constant 0 : i32
    %c0_i32_1 = arith.constant 0 : i32
    return %c0_i32, %c0_i32_0 : i32, i32
  }
  func.func @transform_7(%arg0: i32) -> (i32, i32, i32) {
    %c0_i32 = arith.constant 0 : i32
    %c0_i32_0 = arith.constant 0 : i32
    %c0_i32_1 = arith.constant 0 : i32
    return %arg0, %c0_i32, %c0_i32_0 : i32, i32, i32
  }
}

</mosaic_0001>

<llo_original>
// kernel: _unet_up_forward_nchw.1
$region0: #{_unet_up_forward_nchw.1}
  #allocation0 [shape = 'u32[]', space=smem, size = 0x4, offset = 0x4, fixed_abs, tag = 'smem constant byte address 0x4 - core index']
  #allocation1 [shape = 'u32[144,128]{1,0:T(1,128)}', space=vmem, size = 0x12000, scoped, tag = 'internal scratch']
  #allocation2 [shape = 'bf16[36,192]{1,0:T(8,128)(2,1)}', space=vmem, size = 0x5000, scoped, tag = 'scratch operand']
  #allocation3 [shape = 'bf16[36,128]{1,0:T(8,128)(2,1)}', space=vmem, size = 0x2800, scoped, tag = 'scratch operand']
  %s0 = inlined_call_operand.vmem [shape: bf16[2,16,128], index: 0, kind: input, shape index: {}]
  %s1 = inlined_call_operand.vmem [shape: bf16[2,8,64], index: 1, kind: input, shape index: {}]
  %s2 = inlined_call_operand.vmem [shape: bf16[16,8], index: 2, kind: input, shape index: {}]
  %s3 = inlined_call_operand.vmem [shape: bf16[3,192,128], index: 3, kind: input, shape index: {}]
  %s4 = inlined_call_operand.vmem [shape: f32[1,128], index: 4, kind: input, shape index: {}]
  %s5 = inlined_call_operand.vmem [shape: bf16[3,128,128], index: 5, kind: input, shape index: {}]
  %s6 = inlined_call_operand.vmem [shape: f32[1,128], index: 6, kind: input, shape index: {}]
  %s7 = inlined_call_operand.vmem [shape: f32[2,16,128], index: 7, kind: output, shape index: {}]
  %s8 = sld [smem:[#allocation0]]
  $region38: #{_unet_up_forward_nchw.1} parent=0
    _
  %s10 = ssub.s32 1, %s8
  %s11 = scalar_select 0, %s10, %s8
  // Predicated region
  $region2: #{_unet_up_forward_nchw.1} parent=0 // pred_check
    _
  $region3: #{_unet_up_forward_nchw.1} parent=0 // pred_check_branch
    %13 = sbr.rel (0) target = $region5
  $region4: #{_unet_up_forward_nchw.1} parent=0 // pred_region
    _
  $region5: #{_unet_up_forward_nchw.1} parent=0 // pred_fallthru
    _
  // Predicated region
  $region6: #{_unet_up_forward_nchw.1} parent=0 // pred_check
    _
  $region7: #{_unet_up_forward_nchw.1} parent=0 // pred_check_branch
    %15 = sbr.rel (0) target = $region9
  $region8: #{_unet_up_forward_nchw.1} parent=0 // pred_region
    _
  $region9: #{_unet_up_forward_nchw.1} parent=0 // pred_fallthru
    _
  // Predicated region
  $region10: #{_unet_up_forward_nchw.1} parent=0 // pred_check
    _
  $region11: #{_unet_up_forward_nchw.1} parent=0 // pred_check_branch
    %17 = sbr.rel (0) target = $region13
  $region12: #{_unet_up_forward_nchw.1} parent=0 // pred_region
    _
  $region13: #{_unet_up_forward_nchw.1} parent=0 // pred_fallthru
    _
  // Predicated region
  $region14: #{_unet_up_forward_nchw.1} parent=0 // pred_check
    _
  $region15: #{_unet_up_forward_nchw.1} parent=0 // pred_check_branch
    %19 = sbr.rel (0) target = $region17
  $region16: #{_unet_up_forward_nchw.1} parent=0 // pred_region
    _
  $region17: #{_unet_up_forward_nchw.1} parent=0 // pred_fallthru
    _
  // Predicated region
  $region18: #{_unet_up_forward_nchw.1} parent=0 // pred_check
    _
  $region19: #{_unet_up_forward_nchw.1} parent=0 // pred_check_branch
    %21 = sbr.rel (0) target = $region21
  $region20: #{_unet_up_forward_nchw.1} parent=0 // pred_region
    _
  $region21: #{_unet_up_forward_nchw.1} parent=0 // pred_fallthru
    _
  // Predicated region
  $region22: #{_unet_up_forward_nchw.1} parent=0 // pred_check
    _
  $region23: #{_unet_up_forward_nchw.1} parent=0 // pred_check_branch
    %23 = sbr.rel (0) target = $region25
  $region24: #{_unet_up_forward_nchw.1} parent=0 // pred_region
    _
  $region25: #{_unet_up_forward_nchw.1} parent=0 // pred_fallthru
    _
  // Predicated region
  $region26: #{_unet_up_forward_nchw.1} parent=0 // pred_check
    _
  $region27: #{_unet_up_forward_nchw.1} parent=0 // pred_check_branch
    %25 = sbr.rel (0) target = $region29
  $region28: #{_unet_up_forward_nchw.1} parent=0 // pred_region
    _
  $region29: #{_unet_up_forward_nchw.1} parent=0 // pred_fallthru
    _
  %vm27 = vcmask 1043456
  %vm28 = vcmask 523268
  %vm29 = vmor %vm28, %vm27
  %30 = vst.msk [vmem:[#allocation2] sm:$0xff] %vm29, 0
  %31 = vst.msk [vmem:[#allocation2 + $0x8] sm:$0xff] %vm29, 0
  %32 = vst.msk [vmem:[#allocation2 + $0x10] sm:$0xff] %vm29, 0
  %33 = vst.msk [vmem:[#allocation2 + $0x18] sm:$0xff] %vm29, 0
  %vm34 = vcmask 1041408
  %vm35 = vcmask 521220
  %vm36 = vmor %vm35, %vm34
  %37 = vst.msk [vmem:[#allocation2 + $0x20] sm:$0x33] %vm36, 0
  %38 = vst [vmem:[#allocation3] sm:$0xf] 0
  %39 = vst [vmem:[#allocation3 + $0x4] sm:$0xf] 0
  %40 = vst [vmem:[#allocation3 + $0x8] sm:$0xf] 0
  %41 = vst [vmem:[#allocation3 + $0xc] sm:$0xf] 0
  %42 = vst [vmem:[#allocation3 + $0x10] sm:$0x3] 0
  %v43 = vld [vmem:[%s0] sm:$0xf]
  %v44 = vld [vmem:[%s0 + $0x4] sm:$0xf]
  %vm45 = vsmask.f32 256
  %vm46 = vsmask.f32 4368
  %vm47 = vmor %vm45, %vm46
  %v49 = vshrl.u32 %v43, 16
  %v51 = vrot.slane %v49, 7
  %v52 = vshll.u32 %v43, 16
  %v54 = vor.u32 %v51, %v52
  %v55 = vrot.slane %v51, 4
  %v57 = vshrl.u32 %v44, 16
  %v59 = vrot.slane %v57, 7
  %v60 = vshll.u32 %v44, 16
  %v62 = vor.u32 %v59, %v60
  %v63 = vsel %vm47, %v55, %v62
  %v64 = vrot.slane %v59, 4
  %vm68 = vcmask 1043456
  %vm69 = vsmask.f32 7938
  %vm70 = vmand %vm68, %vm69
  %v71 = vld [vmem:[#allocation2] sm:$0xf]
  %v72 = vsel %vm70, %v54, %v71
  %73 = vst [vmem:[#allocation2] sm:$0xf] %v72
  %74 = vst [vmem:[#allocation2 + $0x8] sm:$0xf] %v63
  %vm75 = vcmask 1040384
  %vm76 = vmand %vm75, %vm45
  %v77 = vld [vmem:[#allocation2 + $0x10] sm:$0x1]
  %v78 = vsel %vm76, %v64, %v77
  %79 = vst [vmem:[#allocation2 + $0x10] sm:$0x1] %v78
  %v80 = vld [vmem:[%s2] sm:$0xf]
  %v81 = vld [vmem:[%s2 + $0x4] sm:$0xf]
  %v82 = vld [vmem:[%s1] sm:$0xf]
  %v85 = vunpack.c.l.b16 %v80
  %v86 = vunpack.c.l.b16 %v81
  %v87 = vpack.c.b16 %v86, %v85
  %vm88 = vcmask 64512
  %v90 = vsel %vm88, %v87, 0
  %v93 = vsel %vm27, %v82, 0
  %95 = vmatprep.subr.bf16.mxu0 0
  %96 = vmatpush1.bf16.msra.mxu0 %v93
  %97 = vmatprep.subr.bf16.mxu0 0
  %98 = vmatpush1.bf16.msra.mxu0 0
  %99 = vmatprep.subr.bf16.mxu0 0
  %100 = vmatpush1.bf16.msra.mxu0 0
  %101 = vmatprep.subr.bf16.mxu0 0
  %102 = vmatpush1.bf16.msra.mxu0 0
  %103 = vmatprep.subr.bf16.mxu0 0
  %104 = vmatpush1.bf16.msra.mxu0 0
  %105 = vmatprep.subr.bf16.mxu0 0
  %106 = vmatpush1.bf16.msra.mxu0 0
  %107 = vmatprep.subr.bf16.mxu0 0
  %108 = vmatpush1.bf16.msra.mxu0 0
  %109 = vmatprep.subr.bf16.mxu0 0
  %110 = vmatpush1.bf16.msra.mxu0 0
  %111 = vmatprep.subr.bf16.mxu0 0
  %112 = vmatpush1.bf16.msra.mxu0 0
  %113 = vmatprep.subr.bf16.mxu0 0
  %114 = vmatpush1.bf16.msra.mxu0 0
  %115 = vmatprep.subr.bf16.mxu0 0
  %116 = vmatpush1.bf16.msra.mxu0 0
  %117 = vmatprep.subr.bf16.mxu0 0
  %118 = vmatpush1.bf16.msra.mxu0 0
  %119 = vmatprep.subr.bf16.mxu0 0
  %120 = vmatpush1.bf16.msra.mxu0 0
  %121 = vmatprep.subr.bf16.mxu0 0
  %122 = vmatpush1.bf16.msra.mxu0 0
  %123 = vmatprep.subr.bf16.mxu0 0
  %124 = vmatpush1.bf16.msra.mxu0 0
  %125 = vmatprep.subr.bf16.mxu0 0
  %126 = vmatpush1.bf16.msra.mxu0 0
  %127 = vmatprep.mubr.bf16.mxu0 0
  %128 = vmatmul.mubr.bf16.gmra.mrb[0].mxu0 %v90
  %v129 = vpop.f32.mrb[0].mxu0
  %v130 = vadd.f32 0.0, %v129
  %v131 = vpop.f32.mrb[0].mxu0
  %v132 = vpop.f32.mrb[0].mxu0
  %v133 = vadd.f32 0.0, %v132
  %v134 = vpop.f32.mrb[0].mxu0
  %135 = vdwg.mxu0
  %v136 = vpack.c.bf16 %v133, %v130
  %v138 = vunpack.c.l.b16 %v136
  %v139 = vunpack.c.h.b16 %v136
  %v140 = vpack.c.b16 %v138, %v138
  %v141 = vpack.c.b16 %v139, %v139
  %v143 = vshrl.u32 %v140, 16
  %v145 = vrot.slane %v143, 7
  %v146 = vshll.u32 %v140, 16
  %v148 = vor.u32 %v145, %v146
  %v149 = vrot.slane %v145, 4
  %v151 = vshrl.u32 %v141, 16
  %v153 = vrot.slane %v151, 7
  %v154 = vshll.u32 %v141, 16
  %v156 = vor.u32 %v153, %v154
  %v157 = vsel %vm47, %v149, %v156
  %v158 = vrot.slane %v153, 4
  %vm162 = vcmask 519168
  %vm163 = vmand %vm162, %vm69
  %v164 = vld [vmem:[#allocation2 + $0x4] sm:$0xf]
  %v165 = vsel %vm163, %v148, %v164
  %166 = vst [vmem:[#allocation2 + $0x4] sm:$0xf] %v165
  %vm167 = vcmask 519168
  %168 = vst.msk [vmem:[#allocation2 + $0xc] sm:$0xf] %vm167, %v157
  %vm169 = vcmask 516096
  %vm170 = vmand %vm169, %vm45
  %v171 = vld [vmem:[#allocation2 + $0x14] sm:$0x1]
  %v172 = vsel %vm170, %v158, %v171
  %173 = vst [vmem:[#allocation2 + $0x14] sm:$0x1] %v172
  %s174 = scalar_lea.vmem %s0, 8
  %v175 = vld [vmem:[%s174] sm:$0xf]
  %v176 = vld [vmem:[%s174 + $0x4] sm:$0xf]
  %vm177 = vsmask.f32 1280
  %vm178 = vsmask.f32 5392
  %vm179 = vmor %vm177, %vm178
  %v181 = vshrl.u32 %v175, 16
  %v183 = vrot.slane %v181, 6
  %v184 = vshll.u32 %v175, 16
  %v186 = vrot.slane %v184, 7
  %v187 = vor.u32 %v183, %v186
  %v188 = vrot.slane %v187, 4
  %v190 = vshrl.u32 %v176, 16
  %v192 = vrot.slane %v190, 6
  %v193 = vshll.u32 %v176, 16
  %v195 = vrot.slane %v193, 7
  %v196 = vor.u32 %v192, %v195
  %v197 = vsel %vm179, %v188, %v196
  %v198 = vrot.slane %v196, 4
  %vm202 = vcmask 1043457
  %vm203 = vsmask.f32 7942
  %vm204 = vmand %vm202, %vm203
  %v205 = vld [vmem:[#allocation2 + $0x10] sm:$0xe]
  %v206 = vsel %vm204, %v187, %v205
  %207 = vst [vmem:[#allocation2 + $0x10] sm:$0xe] %v206
  %208 = vst [vmem:[#allocation2 + $0x18] sm:$0xf] %v197
  %vm209 = vcmask 1041408
  %vm210 = vmand %vm209, %vm177
  %v211 = vld [vmem:[#allocation2 + $0x20] sm:$0x3]
  %v212 = vsel %vm210, %v198, %v211
  %213 = vst [vmem:[#allocation2 + $0x20] sm:$0x3] %v212
  %v214 = vld [vmem:[%s2] sm:$0xf]
  %v215 = vld [vmem:[%s2 + $0x4] sm:$0xf]
  %s216 = scalar_lea.vmem %s1, 4
  %v217 = vld [vmem:[%s216] sm:$0xf]
  %v220 = vunpack.c.l.b16 %v214
  %v221 = vunpack.c.l.b16 %v215
  %v222 = vpack.c.b16 %v221, %v220
  %v224 = vsel %vm88, %v222, 0
  %v227 = vsel %vm27, %v217, 0
  %229 = vmatprep.subr.bf16.mxu0 0
  %230 = vmatpush1.bf16.msra.mxu0 %v227
  %231 = vmatprep.subr.bf16.mxu0 0
  %232 = vmatpush1.bf16.msra.mxu0 0
  %233 = vmatprep.subr.bf16.mxu0 0
  %234 = vmatpush1.bf16.msra.mxu0 0
  %235 = vmatprep.subr.bf16.mxu0 0
  %236 = vmatpush1.bf16.msra.mxu0 0
  %237 = vmatprep.subr.bf16.mxu0 0
  %238 = vmatpush1.bf16.msra.mxu0 0
  %239 = vmatprep.subr.bf16.mxu0 0
  %240 = vmatpush1.bf16.msra.mxu0 0
  %241 = vmatprep.subr.bf16.mxu0 0
  %242 = vmatpush1.bf16.msra.mxu0 0
  %243 = vmatprep.subr.bf16.mxu0 0
  %244 = vmatpush1.bf16.msra.mxu0 0
  %245 = vmatprep.subr.bf16.mxu0 0
  %246 = vmatpush1.bf16.msra.mxu0 0
  %247 = vmatprep.subr.bf16.mxu0 0
  %248 = vmatpush1.bf16.msra.mxu0 0
  %249 = vmatprep.subr.bf16.mxu0 0
  %250 = vmatpush1.bf16.msra.mxu0 0
  %251 = vmatprep.subr.bf16.mxu0 0
  %252 = vmatpush1.bf16.msra.mxu0 0
  %253 = vmatprep.subr.bf16.mxu0 0
  %254 = vmatpush1.bf16.msra.mxu0 0
  %255 = vmatprep.subr.bf16.mxu0 0
  %256 = vmatpush1.bf16.msra.mxu0 0
  %257 = vmatprep.subr.bf16.mxu0 0
  %258 = vmatpush1.bf16.msra.mxu0 0
  %259 = vmatprep.subr.bf16.mxu0 0
  %260 = vmatpush1.bf16.msra.mxu0 0
  %261 = vmatprep.mubr.bf16.mxu0 0
  %262 = vmatmul.mubr.bf16.gmra.mrb[0].mxu0 %v224
  %v263 = vpop.f32.mrb[0].mxu0
  %v264 = vadd.f32 0.0, %v263
  %v265 = vpop.f32.mrb[0].mxu0
  %v266 = vpop.f32.mrb[0].mxu0
  %v267 = vadd.f32 0.0, %v266
  %v268 = vpop.f32.mrb[0].mxu0
  %269 = vdwg.mxu0
  %v270 = vpack.c.bf16 %v267, %v264
  %v272 = vunpack.c.l.b16 %v270
  %v273 = vunpack.c.h.b16 %v270
  %v274 = vpack.c.b16 %v272, %v272
  %v275 = vpack.c.b16 %v273, %v273
  %v277 = vshrl.u32 %v274, 16
  %v279 = vrot.slane %v277, 6
  %v280 = vshll.u32 %v274, 16
  %v282 = vrot.slane %v280, 7
  %v283 = vor.u32 %v279, %v282
  %v284 = vrot.slane %v283, 4
  %v286 = vshrl.u32 %v275, 16
  %v288 = vrot.slane %v286, 6
  %v289 = vshll.u32 %v275, 16
  %v291 = vrot.slane %v289, 7
  %v292 = vor.u32 %v288, %v291
  %v293 = vsel %vm179, %v284, %v292
  %v294 = vrot.slane %v292, 4
  %vm298 = vcmask 519169
  %vm299 = vmand %vm298, %vm203
  %v300 = vld [vmem:[#allocation2 + $0x14] sm:$0xe]
  %v301 = vsel %vm299, %v283, %v300
  %302 = vst [vmem:[#allocation2 + $0x14] sm:$0xe] %v301
  %303 = vst.msk [vmem:[#allocation2 + $0x1c] sm:$0xf] %vm167, %v293
  %vm304 = vcmask 517120
  %vm305 = vmand %vm304, %vm177
  %v306 = vld [vmem:[#allocation2 + $0x24] sm:$0x3]
  %v307 = vsel %vm305, %v294, %v306
  %308 = vst [vmem:[#allocation2 + $0x24] sm:$0x3] %v307
  %v309 = vld [vmem:[#allocation2] sm:$0xff]
  %v310 = vld [vmem:[#allocation2 + $0x8] sm:$0xff]
  %v311 = vld [vmem:[#allocation2 + $0x10] sm:$0xff]
  %v312 = vld [vmem:[#allocation2 + $0x18] sm:$0xff]
  %v313 = vld [vmem:[#allocation2 + $0x20] sm:$0x33]
  %v314 = vld [vmem:[%s3] sm:$0xf]
  %v315 = vld [vmem:[%s3 + $0x4] sm:$0xf]
  %v316 = vld [vmem:[%s3 + $0x8] sm:$0xf]
  %v317 = vld [vmem:[%s3 + $0xc] sm:$0xf]
  %v318 = vld [vmem:[%s3 + $0x10] sm:$0xf]
  %v319 = vld [vmem:[%s3 + $0x14] sm:$0xf]
  %v320 = vld [vmem:[%s3 + $0x18] sm:$0xf]
  %v321 = vld [vmem:[%s3 + $0x1c] sm:$0xf]
  %v322 = vld [vmem:[%s3 + $0x20] sm:$0xf]
  %v323 = vld [vmem:[%s3 + $0x24] sm:$0xf]
  %v324 = vld [vmem:[%s3 + $0x28] sm:$0xf]
  %v325 = vld [vmem:[%s3 + $0x2c] sm:$0xf]
  %v326 = vld [vmem:[%s3 + $0x30] sm:$0xf]
  %v327 = vld [vmem:[%s3 + $0x34] sm:$0xf]
  %v328 = vld [vmem:[%s3 + $0x38] sm:$0xf]
  %v329 = vld [vmem:[%s3 + $0x3c] sm:$0xf]
  %v330 = vld [vmem:[%s3 + $0x40] sm:$0xf]
  %v331 = vld [vmem:[%s3 + $0x44] sm:$0xf]
  %v332 = vld [vmem:[%s3 + $0x48] sm:$0xf]
  %v333 = vld [vmem:[%s3 + $0x4c] sm:$0xf]
  %v334 = vld [vmem:[%s3 + $0x50] sm:$0xf]
  %v335 = vld [vmem:[%s3 + $0x54] sm:$0xf]
  %v336 = vld [vmem:[%s3 + $0x58] sm:$0xf]
  %v337 = vld [vmem:[%s3 + $0x5c] sm:$0xf]
  %v343 = vunpack.c.l.b16 %v309
  %v344 = vunpack.c.h.b16 %v309
  %v345 = vunpack.c.l.b16 %v310
  %v346 = vunpack.c.h.b16 %v310
  %v347 = vunpack.c.l.b16 %v311
  %v348 = vunpack.c.h.b16 %v311
  %v349 = vunpack.c.l.b16 %v312
  %v350 = vunpack.c.h.b16 %v312
  %v351 = vunpack.c.l.b16 %v313
  %v352 = vunpack.c.h.b16 %v313
  %v353 = vpack.c.b16 %v345, %v343
  %v354 = vpack.c.b16 %v346, %v344
  %v355 = vpack.c.b16 %v349, %v347
  %v356 = vpack.c.b16 %v350, %v348
  %v357 = vpack.c.b16 %v351, %v351
  %v358 = vpack.c.b16 %v352, %v352
  %v386 = vunpack.c.l.b16 %v314
  %v387 = vunpack.c.l.b16 %v315
  %v388 = vunpack.c.l.b16 %v316
  %v389 = vunpack.c.l.b16 %v317
  %v390 = vunpack.c.l.b16 %v318
  %v391 = vunpack.c.l.b16 %v319
  %v392 = vunpack.c.l.b16 %v320
  %v393 = vunpack.c.l.b16 %v321
  %v394 = vunpack.c.l.b16 %v322
  %v395 = vunpack.c.l.b16 %v323
  %v396 = vunpack.c.l.b16 %v324
  %v397 = vunpack.c.l.b16 %v325
  %v398 = vunpack.c.l.b16 %v326
  %v399 = vunpack.c.l.b16 %v327
  %v400 = vunpack.c.l.b16 %v328
  %v401 = vunpack.c.l.b16 %v329
  %v402 = vunpack.c.l.b16 %v330
  %v403 = vunpack.c.l.b16 %v331
  %v404 = vunpack.c.l.b16 %v332
  %v405 = vunpack.c.l.b16 %v333
  %v406 = vunpack.c.l.b16 %v334
  %v407 = vunpack.c.l.b16 %v335
  %v408 = vunpack.c.l.b16 %v336
  %v409 = vunpack.c.l.b16 %v337
  %v410 = vpack.c.b16 %v387, %v386
  %v411 = vpack.c.b16 %v389, %v388
  %v412 = vpack.c.b16 %v391, %v390
  %v413 = vpack.c.b16 %v393, %v392
  %v414 = vpack.c.b16 %v395, %v394
  %v415 = vpack.c.b16 %v397, %v396
  %v416 = vpack.c.b16 %v399, %v398
  %v417 = vpack.c.b16 %v401, %v400
  %v418 = vpack.c.b16 %v403, %v402
  %v419 = vpack.c.b16 %v405, %v404
  %v420 = vpack.c.b16 %v407, %v406
  %v421 = vpack.c.b16 %v409, %v408
  %vm434 = vcmask 523264
  %v436 = vsel %vm434, %v354, 0
  %v439 = vsel %vm434, %v356, 0
  %v442 = vsel %vm434, %v358, 0
  %444 = vmatprep.subr.bf16.mxu0 0
  %445 = vmatpush1.bf16.msra.mxu0 %v410
  %446 = vmatprep.subr.bf16.mxu0 0
  %447 = vmatpush1.bf16.msra.mxu0 %v411
  %448 = vmatprep.subr.bf16.mxu0 0
  %449 = vmatpush1.bf16.msra.mxu0 %v412
  %450 = vmatprep.subr.bf16.mxu0 0
  %451 = vmatpush1.bf16.msra.mxu0 %v413
  %452 = vmatprep.subr.bf16.mxu0 0
  %453 = vmatpush1.bf16.msra.mxu0 %v414
  %454 = vmatprep.subr.bf16.mxu0 0
  %455 = vmatpush1.bf16.msra.mxu0 %v415
  %456 = vmatprep.subr.bf16.mxu0 0
  %457 = vmatpush1.bf16.msra.mxu0 %v416
  %458 = vmatprep.subr.bf16.mxu0 0
  %459 = vmatpush1.bf16.msra.mxu0 %v417
  %460 = vmatprep.subr.bf16.mxu0 0
  %461 = vmatpush1.bf16.msra.mxu0 %v418
  %462 = vmatprep.subr.bf16.mxu0 0
  %463 = vmatpush1.bf16.msra.mxu0 %v419
  %464 = vmatprep.subr.bf16.mxu0 0
  %465 = vmatpush1.bf16.msra.mxu0 %v420
  %466 = vmatprep.subr.bf16.mxu0 0
  %467 = vmatpush1.bf16.msra.mxu0 %v421
  %468 = vmatprep.subr.bf16.mxu0 0
  %469 = vmatpush1.bf16.msra.mxu0 0
  %470 = vmatprep.subr.bf16.mxu0 0
  %471 = vmatpush1.bf16.msra.mxu0 0
  %472 = vmatprep.subr.bf16.mxu0 0
  %473 = vmatpush1.bf16.msra.mxu0 0
  %474 = vmatprep.subr.bf16.mxu0 0
  %475 = vmatpush1.bf16.msra.mxu0 0
  %476 = vmatprep.mubr.bf16.mxu0 %v436
  %477 = vmatmul.mubr.bf16.gmra.mrb[0].mxu0 %v353
  %v478 = vpop.f32.mrb[0].mxu0
  %v479 = vadd.f32 0.0, %v478
  %v480 = vpop.f32.mrb[0].mxu0
  %v481 = vpop.f32.mrb[0].mxu0
  %v482 = vadd.f32 0.0, %v481
  %v483 = vpop.f32.mrb[0].mxu0
  %484 = vmatprep.mubr.bf16.mxu0 %v439
  %485 = vmatmul.mubr.bf16.gmra.mrb[0].mxu0 %v355
  %v486 = vpop.f32.mrb[0].mxu0
  %v487 = vadd.f32 0.0, %v486
  %v488 = vpop.f32.mrb[0].mxu0
  %v489 = vpop.f32.mrb[0].mxu0
  %v490 = vadd.f32 0.0, %v489
  %v491 = vpop.f32.mrb[0].mxu0
  %492 = vmatprep.mubr.bf16.mxu0 %v442
  %493 = vmatmul.mubr.bf16.gmra.mrb[0].mxu0 %v357
  %v494 = vpop.f32.mrb[0].mxu0
  %v495 = vadd.f32 0.0, %v494
  %v496 = vpop.f32.mrb[0].mxu0
  %v497 = vpop.f32.mrb[0].mxu0
  %v498 = vpop.f32.mrb[0].mxu0
  %499 = vdwg.mxu0
  %s500 = scalar_lea.vmem %s3, 96
  %v501 = vld [vmem:[%s500] sm:$0xf]
  %v502 = vld [vmem:[%s500 + $0x4] sm:$0xf]
  %v503 = vld [vmem:[%s500 + $0x8] sm:$0xf]
  %v504 = vld [vmem:[%s500 + $0xc] sm:$0xf]
  %v505 = vld [vmem:[%s500 + $0x10] sm:$0xf]
  %v506 = vld [vmem:[%s500 + $0x14] sm:$0xf]
  %v507 = vld [vmem:[%s500 + $0x18] sm:$0xf]
  %v508 = vld [vmem:[%s500 + $0x1c] sm:$0xf]
  %v509 = vld [vmem:[%s500 + $0x20] sm:$0xf]
  %v510 = vld [vmem:[%s500 + $0x24] sm:$0xf]
  %v511 = vld [vmem:[%s500 + $0x28] sm:$0xf]
  %v512 = vld [vmem:[%s500 + $0x2c] sm:$0xf]
  %v513 = vld [vmem:[%s500 + $0x30] sm:$0xf]
  %v514 = vld [vmem:[%s500 + $0x34] sm:$0xf]
  %v515 = vld [vmem:[%s500 + $0x38] sm:$0xf]
  %v516 = vld [vmem:[%s500 + $0x3c] sm:$0xf]
  %v517 = vld [vmem:[%s500 + $0x40] sm:$0xf]
  %v518 = vld [vmem:[%s500 + $0x44] sm:$0xf]
  %v519 = vld [vmem:[%s500 + $0x48] sm:$0xf]
  %v520 = vld [vmem:[%s500 + $0x4c] sm:$0xf]
  %v521 = vld [vmem:[%s500 + $0x50] sm:$0xf]
  %v522 = vld [vmem:[%s500 + $0x54] sm:$0xf]
  %v523 = vld [vmem:[%s500 + $0x58] sm:$0xf]
  %v524 = vld [vmem:[%s500 + $0x5c] sm:$0xf]
  %v549 = vunpack.c.l.b16 %v501
  %v550 = vunpack.c.l.b16 %v502
  %v551 = vunpack.c.l.b16 %v503
  %v552 = vunpack.c.l.b16 %v504
  %v553 = vunpack.c.l.b16 %v505
  %v554 = vunpack.c.l.b16 %v506
  %v555 = vunpack.c.l.b16 %v507
  %v556 = vunpack.c.l.b16 %v508
  %v557 = vunpack.c.l.b16 %v509
  %v558 = vunpack.c.l.b16 %v510
  %v559 = vunpack.c.l.b16 %v511
  %v560 = vunpack.c.l.b16 %v512
  %v561 = vunpack.c.l.b16 %v513
  %v562 = vunpack.c.l.b16 %v514
  %v563 = vunpack.c.l.b16 %v515
  %v564 = vunpack.c.l.b16 %v516
  %v565 = vunpack.c.l.b16 %v517
  %v566 = vunpack.c.l.b16 %v518
  %v567 = vunpack.c.l.b16 %v519
  %v568 = vunpack.c.l.b16 %v520
  %v569 = vunpack.c.l.b16 %v521
  %v570 = vunpack.c.l.b16 %v522
  %v571 = vunpack.c.l.b16 %v523
  %v572 = vunpack.c.l.b16 %v524
  %v573 = vpack.c.b16 %v550, %v549
  %v574 = vpack.c.b16 %v552, %v551
  %v575 = vpack.c.b16 %v554, %v553
  %v576 = vpack.c.b16 %v556, %v555
  %v577 = vpack.c.b16 %v558, %v557
  %v578 = vpack.c.b16 %v560, %v559
  %v579 = vpack.c.b16 %v562, %v561
  %v580 = vpack.c.b16 %v564, %v563
  %v581 = vpack.c.b16 %v566, %v565
  %v582 = vpack.c.b16 %v568, %v567
  %v583 = vpack.c.b16 %v570, %v569
  %v584 = vpack.c.b16 %v572, %v571
  %597 = vmatprep.subr.bf16.mxu0 0
  %598 = vmatpush1.bf16.msra.mxu0 %v573
  %599 = vmatprep.subr.bf16.mxu0 0
  %600 = vmatpush1.bf16.msra.mxu0 %v574
  %601 = vmatprep.subr.bf16.mxu0 0
  %602 = vmatpush1.bf16.msra.mxu0 %v575
  %603 = vmatprep.subr.bf16.mxu0 0
  %604 = vmatpush1.bf16.msra.mxu0 %v576
  %605 = vmatprep.subr.bf16.mxu0 0
  %606 = vmatpush1.bf16.msra.mxu0 %v577
  %607 = vmatprep.subr.bf16.mxu0 0
  %608 = vmatpush1.bf16.msra.mxu0 %v578
  %609 = vmatprep.subr.bf16.mxu0 0
  %610 = vmatpush1.bf16.msra.mxu0 %v579
  %611 = vmatprep.subr.bf16.mxu0 0
  %612 = vmatpush1.bf16.msra.mxu0 %v580
  %613 = vmatprep.subr.bf16.mxu0 0
  %614 = vmatpush1.bf16.msra.mxu0 %v581
  %615 = vmatprep.subr.bf16.mxu0 0
  %616 = vmatpush1.bf16.msra.mxu0 %v582
  %617 = vmatprep.subr.bf16.mxu0 0
  %618 = vmatpush1.bf16.msra.mxu0 %v583
  %619 = vmatprep.subr.bf16.mxu0 0
  %620 = vmatpush1.bf16.msra.mxu0 %v584
  %621 = vmatprep.subr.bf16.mxu0 0
  %622 = vmatpush1.bf16.msra.mxu0 0
  %623 = vmatprep.subr.bf16.mxu0 0
  %624 = vmatpush1.bf16.msra.mxu0 0
  %625 = vmatprep.subr.bf16.mxu0 0
  %626 = vmatpush1.bf16.msra.mxu0 0
  %627 = vmatprep.subr.bf16.mxu0 0
  %628 = vmatpush1.bf16.msra.mxu0 0
  %629 = vmatprep.mubr.bf16.mxu0 %v436
  %630 = vmatmul.mubr.bf16.gmra.mrb[0].mxu0 %v353
  %v631 = vpop.f32.mrb[0].mxu0
  %v632 = vadd.f32 0.0, %v631
  %v633 = vpop.f32.mrb[0].mxu0
  %v634 = vpop.f32.mrb[0].mxu0
  %v635 = vadd.f32 0.0, %v634
  %v636 = vpop.f32.mrb[0].mxu0
  %637 = vmatprep.mubr.bf16.mxu0 %v439
  %638 = vmatmul.mubr.bf16.gmra.mrb[0].mxu0 %v355
  %v639 = vpop.f32.mrb[0].mxu0
  %v640 = vadd.f32 0.0, %v639
  %v641 = vpop.f32.mrb[0].mxu0
  %v642 = vpop.f32.mrb[0].mxu0
  %v643 = vadd.f32 0.0, %v642
  %v644 = vpop.f32.mrb[0].mxu0
  %645 = vmatprep.mubr.bf16.mxu0 %v442
  %646 = vmatmul.mubr.bf16.gmra.mrb[0].mxu0 %v357
  %v647 = vpop.f32.mrb[0].mxu0
  %v648 = vadd.f32 0.0, %v647
  %v649 = vpop.f32.mrb[0].mxu0
  %v650 = vpop.f32.mrb[0].mxu0
  %v651 = vpop.f32.mrb[0].mxu0
  %652 = vdwg.mxu0
  %s653 = scalar_lea.vmem %s3, 192
  %v654 = vld [vmem:[%s653] sm:$0xf]
  %v655 = vld [vmem:[%s653 + $0x4] sm:$0xf]
  %v656 = vld [vmem:[%s653 + $0x8] sm:$0xf]
  %v657 = vld [vmem:[%s653 + $0xc] sm:$0xf]
  %v658 = vld [vmem:[%s653 + $0x10] sm:$0xf]
  %v659 = vld [vmem:[%s653 + $0x14] sm:$0xf]
  %v660 = vld [vmem:[%s653 + $0x18] sm:$0xf]
  %v661 = vld [vmem:[%s653 + $0x1c] sm:$0xf]
  %v662 = vld [vmem:[%s653 + $0x20] sm:$0xf]
  %v663 = vld [vmem:[%s653 + $0x24] sm:$0xf]
  %v664 = vld [vmem:[%s653 + $0x28] sm:$0xf]
  %v665 = vld [vmem:[%s653 + $0x2c] sm:$0xf]
  %v666 = vld [vmem:[%s653 + $0x30] sm:$0xf]
  %v667 = vld [vmem:[%s653 + $0x34] sm:$0xf]
  %v668 = vld [vmem:[%s653 + $0x38] sm:$0xf]
  %v669 = vld [vmem:[%s653 + $0x3c] sm:$0xf]
  %v670 = vld [vmem:[%s653 + $0x40] sm:$0xf]
  %v671 = vld [vmem:[%s653 + $0x44] sm:$0xf]
  %v672 = vld [vmem:[%s653 + $0x48] sm:$0xf]
  %v673 = vld [vmem:[%s653 + $0x4c] sm:$0xf]
  %v674 = vld [vmem:[%s653 + $0x50] sm:$0xf]
  %v675 = vld [vmem:[%s653 + $0x54] sm:$0xf]
  %v676 = vld [vmem:[%s653 + $0x58] sm:$0xf]
  %v677 = vld [vmem:[%s653 + $0x5c] sm:$0xf]
  %v702 = vunpack.c.l.b16 %v654
  %v703 = vunpack.c.l.b16 %v655
  %v704 = vunpack.c.l.b16 %v656
  %v705 = vunpack.c.l.b16 %v657
  %v706 = vunpack.c.l.b16 %v658
  %v707 = vunpack.c.l.b16 %v659
  %v708 = vunpack.c.l.b16 %v660
  %v709 = vunpack.c.l.b16 %v661
  %v710 = vunpack.c.l.b16 %v662
  %v711 = vunpack.c.l.b16 %v663
  %v712 = vunpack.c.l.b16 %v664
  %v713 = vunpack.c.l.b16 %v665
  %v714 = vunpack.c.l.b16 %v666
  %v715 = vunpack.c.l.b16 %v667
  %v716 = vunpack.c.l.b16 %v668
  %v717 = vunpack.c.l.b16 %v669
  %v718 = vunpack.c.l.b16 %v670
  %v719 = vunpack.c.l.b16 %v671
  %v720 = vunpack.c.l.b16 %v672
  %v721 = vunpack.c.l.b16 %v673
  %v722 = vunpack.c.l.b16 %v674
  %v723 = vunpack.c.l.b16 %v675
  %v724 = vunpack.c.l.b16 %v676
  %v725 = vunpack.c.l.b16 %v677
  %v726 = vpack.c.b16 %v703, %v702
  %v727 = vpack.c.b16 %v705, %v704
  %v728 = vpack.c.b16 %v707, %v706
  %v729 = vpack.c.b16 %v709, %v708
  %v730 = vpack.c.b16 %v711, %v710
  %v731 = vpack.c.b16 %v713, %v712
  %v732 = vpack.c.b16 %v715, %v714
  %v733 = vpack.c.b16 %v717, %v716
  %v734 = vpack.c.b16 %v719, %v718
  %v735 = vpack.c.b16 %v721, %v720
  %v736 = vpack.c.b16 %v723, %v722
  %v737 = vpack.c.b16 %v725, %v724
  %750 = vmatprep.subr.bf16.mxu0 0
  %751 = vmatpush1.bf16.msra.mxu0 %v726
  %752 = vmatprep.subr.bf16.mxu0 0
  %753 = vmatpush1.bf16.msra.mxu0 %v727
  %754 = vmatprep.subr.bf16.mxu0 0
  %755 = vmatpush1.bf16.msra.mxu0 %v728
  %756 = vmatprep.subr.bf16.mxu0 0
  %757 = vmatpush1.bf16.msra.mxu0 %v729
  %758 = vmatprep.subr.bf16.mxu0 0
  %759 = vmatpush1.bf16.msra.mxu0 %v730
  %760 = vmatprep.subr.bf16.mxu0 0
  %761 = vmatpush1.bf16.msra.mxu0 %v731
  %762 = vmatprep.subr.bf16.mxu0 0
  %763 = vmatpush1.bf16.msra.mxu0 %v732
  %764 = vmatprep.subr.bf16.mxu0 0
  %765 = vmatpush1.bf16.msra.mxu0 %v733
  %766 = vmatprep.subr.bf16.mxu0 0
  %767 = vmatpush1.bf16.msra.mxu0 %v734
  %768 = vmatprep.subr.bf16.mxu0 0
  %769 = vmatpush1.bf16.msra.mxu0 %v735
  %770 = vmatprep.subr.bf16.mxu0 0
  %771 = vmatpush1.bf16.msra.mxu0 %v736
  %772 = vmatprep.subr.bf16.mxu0 0
  %773 = vmatpush1.bf16.msra.mxu0 %v737
  %774 = vmatprep.subr.bf16.mxu0 0
  %775 = vmatpush1.bf16.msra.mxu0 0
  %776 = vmatprep.subr.bf16.mxu0 0
  %777 = vmatpush1.bf16.msra.mxu0 0
  %778 = vmatprep.subr.bf16.mxu0 0
  %779 = vmatpush1.bf16.msra.mxu0 0
  %780 = vmatprep.subr.bf16.mxu0 0
  %781 = vmatpush1.bf16.msra.mxu0 0
  %782 = vmatprep.mubr.bf16.mxu0 %v436
  %783 = vmatmul.mubr.bf16.gmra.mrb[0].mxu0 %v353
  %v784 = vpop.f32.mrb[0].mxu0
  %v785 = vadd.f32 0.0, %v784
  %v786 = vpop.f32.mrb[0].mxu0
  %v787 = vpop.f32.mrb[0].mxu0
  %v788 = vadd.f32 0.0, %v787
  %v789 = vpop.f32.mrb[0].mxu0
  %790 = vmatprep.mubr.bf16.mxu0 %v439
  %791 = vmatmul.mubr.bf16.gmra.mrb[0].mxu0 %v355
  %v792 = vpop.f32.mrb[0].mxu0
  %v793 = vadd.f32 0.0, %v792
  %v794 = vpop.f32.mrb[0].mxu0
  %v795 = vpop.f32.mrb[0].mxu0
  %v796 = vadd.f32 0.0, %v795
  %v797 = vpop.f32.mrb[0].mxu0
  %798 = vmatprep.mubr.bf16.mxu0 %v442
  %799 = vmatmul.mubr.bf16.gmra.mrb[0].mxu0 %v357
  %v800 = vpop.f32.mrb[0].mxu0
  %v801 = vadd.f32 0.0, %v800
  %v802 = vpop.f32.mrb[0].mxu0
  %v803 = vpop.f32.mrb[0].mxu0
  %v804 = vpop.f32.mrb[0].mxu0
  %805 = vdwg.mxu0
  %vm811 = vcmask 1046528
  %v812 = vrot.slane %v632, 1
  %v813 = vrot.slane %v635, 1
  %v814 = vsel %vm811, %v812, %v813
  %v815 = vrot.slane %v640, 1
  %v816 = vsel %vm811, %v813, %v815
  %v817 = vrot.slane %v643, 1
  %v818 = vsel %vm811, %v815, %v817
  %v819 = vrot.slane %v648, 1
  %v820 = vsel %vm811, %v817, %v819
  %v826 = vadd.f32 %v479, %v814
  %v827 = vadd.f32 %v482, %v816
  %v828 = vadd.f32 %v487, %v818
  %v829 = vadd.f32 %v490, %v820
  %v830 = vadd.f32 %v495, %v819
  %vm836 = vcmask 1045504
  %v837 = vrot.slane %v785, 2
  %v838 = vrot.slane %v788, 2
  %v839 = vsel %vm836, %v837, %v838
  %v840 = vrot.slane %v793, 2
  %v841 = vsel %vm836, %v838, %v840
  %v842 = vrot.slane %v796, 2
  %v843 = vsel %vm836, %v840, %v842
  %v844 = vrot.slane %v801, 2
  %v845 = vsel %vm836, %v842, %v844
  %v851 = vadd.f32 %v826, %v839
  %v852 = vadd.f32 %v827, %v841
  %v853 = vadd.f32 %v828, %v843
  %v854 = vadd.f32 %v829, %v845
  %v855 = vadd.f32 %v830, %v844
  %v856 = vld [vmem:[%s4] sm:$0x1]
  %v858 = vlaneseq
  %v859 = vshrl.u32 %v858, 7
  %v860 = vsub.s32 0, %v859
  %v861 = vrot.slane %v856, %v860
  %v863 = vadd.f32 %v851, %v861
  %v864 = vadd.f32 %v852, %v861
  %v865 = vmax.f32 %v863, 0.0
  %v866 = vmax.f32 %v864, 0.0
  %v867 = vpack.c.bf16 %v866, %v865
  %v869 = vunpack.c.l.b16 %v867
  %v870 = vunpack.c.h.b16 %v867
  %v871 = vpack.c.b16 %v869, %v869
  %v872 = vpack.c.b16 %v870, %v870
  %v874 = vshrl.u32 %v871, 16
  %v876 = vrot.slane %v874, 7
  %v877 = vshll.u32 %v871, 16
  %v879 = vor.u32 %v876, %v877
  %v880 = vrot.slane %v876, 4
  %v882 = vshrl.u32 %v872, 16
  %v884 = vrot.slane %v882, 7
  %v885 = vshll.u32 %v872, 16
  %v887 = vor.u32 %v884, %v885
  %v888 = vsel %vm47, %v880, %v887
  %v889 = vrot.slane %v884, 4
  %v893 = vld [vmem:[#allocation3] sm:$0xf]
  %v894 = vsel %vm70, %v879, %v893
  %895 = vst [vmem:[#allocation3] sm:$0xf] %v894
  %896 = vst [vmem:[#allocation3 + $0x4] sm:$0xf] %v888
  %v897 = vld [vmem:[#allocation3 + $0x8] sm:$0x1]
  %v898 = vsel %vm76, %v889, %v897
  %899 = vst [vmem:[#allocation3 + $0x8] sm:$0x1] %v898
  %v900 = vld [vmem:[%s4] sm:$0x1]
  %v902 = vlaneseq
  %v903 = vshrl.u32 %v902, 7
  %v904 = vsub.s32 0, %v903
  %v905 = vrot.slane %v900, %v904
  %v907 = vadd.f32 %v853, %v905
  %v908 = vadd.f32 %v854, %v905
  %v909 = vadd.f32 %v855, %v905
  %v910 = vmax.f32 %v907, 0.0
  %v911 = vmax.f32 %v908, 0.0
  %v912 = vmax.f32 %v909, 0.0
  %v913 = vpack.c.bf16 %v911, %v910
  %v914 = vpack.c.bf16 %v912, %v912
  %v917 = vunpack.c.l.b16 %v913
  %v918 = vunpack.c.h.b16 %v913
  %v919 = vunpack.c.l.b16 %v914
  %v920 = vpack.c.b16 %v917, %v917
  %v921 = vpack.c.b16 %v918, %v918
  %v922 = vpack.c.b16 %v919, %v919
  %v924 = vshrl.u32 %v920, 16
  %v926 = vrot.slane %v924, 7
  %v927 = vshll.u32 %v920, 16
  %v929 = vor.u32 %v926, %v927
  %v930 = vrot.slane %v926, 4
  %v932 = vshrl.u32 %v921, 16
  %v934 = vrot.slane %v932, 7
  %v935 = vshll.u32 %v921, 16
  %v937 = vor.u32 %v934, %v935
  %v938 = vsel %vm47, %v930, %v937
  %v939 = vrot.slane %v934, 4
  %v941 = vshrl.u32 %v922, 16
  %v943 = vrot.slane %v941, 7
  %v944 = vshll.u32 %v922, 16
  %v946 = vor.u32 %v943, %v944
  %v947 = vsel %vm47, %v939, %v946
  %v951 = vld [vmem:[#allocation3 + $0x8] sm:$0xe]
  %v952 = vsel %vm204, %v929, %v951
  %953 = vst [vmem:[#allocation3 + $0x8] sm:$0xe] %v952
  %954 = vst [vmem:[#allocation3 + $0xc] sm:$0xf] %v938
  %v955 = vld [vmem:[#allocation3 + $0x10] sm:$0x3]
  %v956 = vsel %vm210, %v947, %v955
  %957 = vst [vmem:[#allocation3 + $0x10] sm:$0x3] %v956
  %v958 = vld [vmem:[#allocation3] sm:$0xf]
  %v959 = vld [vmem:[#allocation3 + $0x4] sm:$0xf]
  %v960 = vld [vmem:[#allocation3 + $0x8] sm:$0xf]
  %v961 = vld [vmem:[#allocation3 + $0xc] sm:$0xf]
  %v962 = vld [vmem:[#allocation3 + $0x10] sm:$0x3]
  %v963 = vld [vmem:[%s5] sm:$0xf]
  %v964 = vld [vmem:[%s5 + $0x4] sm:$0xf]
  %v965 = vld [vmem:[%s5 + $0x8] sm:$0xf]
  %v966 = vld [vmem:[%s5 + $0xc] sm:$0xf]
  %v967 = vld [vmem:[%s5 + $0x10] sm:$0xf]
  %v968 = vld [vmem:[%s5 + $0x14] sm:$0xf]
  %v969 = vld [vmem:[%s5 + $0x18] sm:$0xf]
  %v970 = vld [vmem:[%s5 + $0x1c] sm:$0xf]
  %v971 = vld [vmem:[%s5 + $0x20] sm:$0xf]
  %v972 = vld [vmem:[%s5 + $0x24] sm:$0xf]
  %v973 = vld [vmem:[%s5 + $0x28] sm:$0xf]
  %v974 = vld [vmem:[%s5 + $0x2c] sm:$0xf]
  %v975 = vld [vmem:[%s5 + $0x30] sm:$0xf]
  %v976 = vld [vmem:[%s5 + $0x34] sm:$0xf]
  %v977 = vld [vmem:[%s5 + $0x38] sm:$0xf]
  %v978 = vld [vmem:[%s5 + $0x3c] sm:$0xf]
  %v984 = vunpack.c.l.b16 %v958
  %v985 = vunpack.c.l.b16 %v959
  %v986 = vunpack.c.l.b16 %v960
  %v987 = vunpack.c.l.b16 %v961
  %v988 = vunpack.c.l.b16 %v962
  %v989 = vpack.c.b16 %v985, %v984
  %v990 = vpack.c.b16 %v987, %v986
  %v991 = vpack.c.b16 %v988, %v988
  %v1011 = vunpack.c.l.b16 %v963
  %v1012 = vunpack.c.l.b16 %v964
  %v1013 = vunpack.c.l.b16 %v965
  %v1014 = vunpack.c.l.b16 %v966
  %v1015 = vunpack.c.l.b16 %v967
  %v1016 = vunpack.c.l.b16 %v968
  %v1017 = vunpack.c.l.b16 %v969
  %v1018 = vunpack.c.l.b16 %v970
  %v1019 = vunpack.c.l.b16 %v971
  %v1020 = vunpack.c.l.b16 %v972
  %v1021 = vunpack.c.l.b16 %v973
  %v1022 = vunpack.c.l.b16 %v974
  %v1023 = vunpack.c.l.b16 %v975
  %v1024 = vunpack.c.l.b16 %v976
  %v1025 = vunpack.c.l.b16 %v977
  %v1026 = vunpack.c.l.b16 %v978
  %v1027 = vpack.c.b16 %v1012, %v1011
  %v1028 = vpack.c.b16 %v1014, %v1013
  %v1029 = vpack.c.b16 %v1016, %v1015
  %v1030 = vpack.c.b16 %v1018, %v1017
  %v1031 = vpack.c.b16 %v1020, %v1019
  %v1032 = vpack.c.b16 %v1022, %v1021
  %v1033 = vpack.c.b16 %v1024, %v1023
  %v1034 = vpack.c.b16 %v1026, %v1025
  %1043 = vmatprep.subr.bf16.mxu0 0
  %1044 = vmatpush1.bf16.msra.mxu0 %v1027
  %1045 = vmatprep.subr.bf16.mxu0 0
  %1046 = vmatpush1.bf16.msra.mxu0 %v1028
  %1047 = vmatprep.subr.bf16.mxu0 0
  %1048 = vmatpush1.bf16.msra.mxu0 %v1029
  %1049 = vmatprep.subr.bf16.mxu0 0
  %1050 = vmatpush1.bf16.msra.mxu0 %v1030
  %1051 = vmatprep.subr.bf16.mxu0 0
  %1052 = vmatpush1.bf16.msra.mxu0 %v1031
  %1053 = vmatprep.subr.bf16.mxu0 0
  %1054 = vmatpush1.bf16.msra.mxu0 %v1032
  %1055 = vmatprep.subr.bf16.mxu0 0
  %1056 = vmatpush1.bf16.msra.mxu0 %v1033
  %1057 = vmatprep.subr.bf16.mxu0 0
  %1058 = vmatpush1.bf16.msra.mxu0 %v1034
  %1059 = vmatprep.subr.bf16.mxu0 0
  %1060 = vmatpush1.bf16.msra.mxu0 0
  %1061 = vmatprep.subr.bf16.mxu0 0
  %1062 = vmatpush1.bf16.msra.mxu0 0
  %1063 = vmatprep.subr.bf16.mxu0 0
  %1064 = vmatpush1.bf16.msra.mxu0 0
  %1065 = vmatprep.subr.bf16.mxu0 0
  %1066 = vmatpush1.bf16.msra.mxu0 0
  %1067 = vmatprep.subr.bf16.mxu0 0
  %1068 = vmatpush1.bf16.msra.mxu0 0
  %1069 = vmatprep.subr.bf16.mxu0 0
  %1070 = vmatpush1.bf16.msra.mxu0 0
  %1071 = vmatprep.subr.bf16.mxu0 0
  %1072 = vmatpush1.bf16.msra.mxu0 0
  %1073 = vmatprep.subr.bf16.mxu0 0
  %1074 = vmatpush1.bf16.msra.mxu0 0
  %1075 = vmatprep.mubr.bf16.mxu0 0
  %1076 = vmatmul.mubr.bf16.gmra.mrb[0].mxu0 %v989
  %v1077 = vpop.f32.mrb[0].mxu0
  %v1078 = vadd.f32 0.0, %v1077
  %v1079 = vpop.f32.mrb[0].mxu0
  %v1080 = vpop.f32.mrb[0].mxu0
  %v1081 = vadd.f32 0.0, %v1080
  %v1082 = vpop.f32.mrb[0].mxu0
  %1083 = vmatprep.mubr.bf16.mxu0 0
  %1084 = vmatmul.mubr.bf16.gmra.mrb[0].mxu0 %v990
  %v1085 = vpop.f32.mrb[0].mxu0
  %v1086 = vadd.f32 0.0, %v1085
  %v1087 = vpop.f32.mrb[0].mxu0
  %v1088 = vpop.f32.mrb[0].mxu0
  %v1089 = vadd.f32 0.0, %v1088
  %v1090 = vpop.f32.mrb[0].mxu0
  %1091 = vmatprep.mubr.bf16.mxu0 0
  %1092 = vmatmul.mubr.bf16.gmra.mrb[0].mxu0 %v991
  %v1093 = vpop.f32.mrb[0].mxu0
  %v1094 = vadd.f32 0.0, %v1093
  %v1095 = vpop.f32.mrb[0].mxu0
  %v1096 = vpop.f32.mrb[0].mxu0
  %v1097 = vpop.f32.mrb[0].mxu0
  %1098 = vdwg.mxu0
  %s1099 = scalar_lea.vmem %s5, 64
  %v1100 = vld [vmem:[%s1099] sm:$0xf]
  %v1101 = vld [vmem:[%s1099 + $0x4] sm:$0xf]
  %v1102 = vld [vmem:[%s1099 + $0x8] sm:$0xf]
  %v1103 = vld [vmem:[%s1099 + $0xc] sm:$0xf]
  %v1104 = vld [vmem:[%s1099 + $0x10] sm:$0xf]
  %v1105 = vld [vmem:[%s1099 + $0x14] sm:$0xf]
  %v1106 = vld [vmem:[%s1099 + $0x18] sm:$0xf]
  %v1107 = vld [vmem:[%s1099 + $0x1c] sm:$0xf]
  %v1108 = vld [vmem:[%s1099 + $0x20] sm:$0xf]
  %v1109 = vld [vmem:[%s1099 + $0x24] sm:$0xf]
  %v1110 = vld [vmem:[%s1099 + $0x28] sm:$0xf]
  %v1111 = vld [vmem:[%s1099 + $0x2c] sm:$0xf]
  %v1112 = vld [vmem:[%s1099 + $0x30] sm:$0xf]
  %v1113 = vld [vmem:[%s1099 + $0x34] sm:$0xf]
  %v1114 = vld [vmem:[%s1099 + $0x38] sm:$0xf]
  %v1115 = vld [vmem:[%s1099 + $0x3c] sm:$0xf]
  %v1132 = vunpack.c.l.b16 %v1100
  %v1133 = vunpack.c.l.b16 %v1101
  %v1134 = vunpack.c.l.b16 %v1102
  %v1135 = vunpack.c.l.b16 %v1103
  %v1136 = vunpack.c.l.b16 %v1104
  %v1137 = vunpack.c.l.b16 %v1105
  %v1138 = vunpack.c.l.b16 %v1106
  %v1139 = vunpack.c.l.b16 %v1107
  %v1140 = vunpack.c.l.b16 %v1108
  %v1141 = vunpack.c.l.b16 %v1109
  %v1142 = vunpack.c.l.b16 %v1110
  %v1143 = vunpack.c.l.b16 %v1111
  %v1144 = vunpack.c.l.b16 %v1112
  %v1145 = vunpack.c.l.b16 %v1113
  %v1146 = vunpack.c.l.b16 %v1114
  %v1147 = vunpack.c.l.b16 %v1115
  %v1148 = vpack.c.b16 %v1133, %v1132
  %v1149 = vpack.c.b16 %v1135, %v1134
  %v1150 = vpack.c.b16 %v1137, %v1136
  %v1151 = vpack.c.b16 %v1139, %v1138
  %v1152 = vpack.c.b16 %v1141, %v1140
  %v1153 = vpack.c.b16 %v1143, %v1142
  %v1154 = vpack.c.b16 %v1145, %v1144
  %v1155 = vpack.c.b16 %v1147, %v1146
  %1164 = vmatprep.subr.bf16.mxu0 0
  %1165 = vmatpush1.bf16.msra.mxu0 %v1148
  %1166 = vmatprep.subr.bf16.mxu0 0
  %1167 = vmatpush1.bf16.msra.mxu0 %v1149
  %1168 = vmatprep.subr.bf16.mxu0 0
  %1169 = vmatpush1.bf16.msra.mxu0 %v1150
  %1170 = vmatprep.subr.bf16.mxu0 0
  %1171 = vmatpush1.bf16.msra.mxu0 %v1151
  %1172 = vmatprep.subr.bf16.mxu0 0
  %1173 = vmatpush1.bf16.msra.mxu0 %v1152
  %1174 = vmatprep.subr.bf16.mxu0 0
  %1175 = vmatpush1.bf16.msra.mxu0 %v1153
  %1176 = vmatprep.subr.bf16.mxu0 0
  %1177 = vmatpush1.bf16.msra.mxu0 %v1154
  %1178 = vmatprep.subr.bf16.mxu0 0
  %1179 = vmatpush1.bf16.msra.mxu0 %v1155
  %1180 = vmatprep.subr.bf16.mxu0 0
  %1181 = vmatpush1.bf16.msra.mxu0 0
  %1182 = vmatprep.subr.bf16.mxu0 0
  %1183 = vmatpush1.bf16.msra.mxu0 0
  %1184 = vmatprep.subr.bf16.mxu0 0
  %1185 = vmatpush1.bf16.msra.mxu0 0
  %1186 = vmatprep.subr.bf16.mxu0 0
  %1187 = vmatpush1.bf16.msra.mxu0 0
  %1188 = vmatprep.subr.bf16.mxu0 0
  %1189 = vmatpush1.bf16.msra.mxu0 0
  %1190 = vmatprep.subr.bf16.mxu0 0
  %1191 = vmatpush1.bf16.msra.mxu0 0
  %1192 = vmatprep.subr.bf16.mxu0 0
  %1193 = vmatpush1.bf16.msra.mxu0 0
  %1194 = vmatprep.subr.bf16.mxu0 0
  %1195 = vmatpush1.bf16.msra.mxu0 0
  %1196 = vmatprep.mubr.bf16.mxu0 0
  %1197 = vmatmul.mubr.bf16.gmra.mrb[0].mxu0 %v989
  %v1198 = vpop.f32.mrb[0].mxu0
  %v1199 = vadd.f32 0.0, %v1198
  %v1200 = vpop.f32.mrb[0].mxu0
  %v1201 = vpop.f32.mrb[0].mxu0
  %v1202 = vadd.f32 0.0, %v1201
  %v1203 = vpop.f32.mrb[0].mxu0
  %1204 = vmatprep.mubr.bf16.mxu0 0
  %1205 = vmatmul.mubr.bf16.gmra.mrb[0].mxu0 %v990
  %v1206 = vpop.f32.mrb[0].mxu0
  %v1207 = vadd.f32 0.0, %v1206
  %v1208 = vpop.f32.mrb[0].mxu0
  %v1209 = vpop.f32.mrb[0].mxu0
  %v1210 = vadd.f32 0.0, %v1209
  %v1211 = vpop.f32.mrb[0].mxu0
  %1212 = vmatprep.mubr.bf16.mxu0 0
  %1213 = vmatmul.mubr.bf16.gmra.mrb[0].mxu0 %v991
  %v1214 = vpop.f32.mrb[0].mxu0
  %v1215 = vadd.f32 0.0, %v1214
  %v1216 = vpop.f32.mrb[0].mxu0
  %v1217 = vpop.f32.mrb[0].mxu0
  %v1218 = vpop.f32.mrb[0].mxu0
  %1219 = vdwg.mxu0
  %s1220 = scalar_lea.vmem %s5, 128
  %v1221 = vld [vmem:[%s1220] sm:$0xf]
  %v1222 = vld [vmem:[%s1220 + $0x4] sm:$0xf]
  %v1223 = vld [vmem:[%s1220 + $0x8] sm:$0xf]
  %v1224 = vld [vmem:[%s1220 + $0xc] sm:$0xf]
  %v1225 = vld [vmem:[%s1220 + $0x10] sm:$0xf]
  %v1226 = vld [vmem:[%s1220 + $0x14] sm:$0xf]
  %v1227 = vld [vmem:[%s1220 + $0x18] sm:$0xf]
  %v1228 = vld [vmem:[%s1220 + $0x1c] sm:$0xf]
  %v1229 = vld [vmem:[%s1220 + $0x20] sm:$0xf]
  %v1230 = vld [vmem:[%s1220 + $0x24] sm:$0xf]
  %v1231 = vld [vmem:[%s1220 + $0x28] sm:$0xf]
  %v1232 = vld [vmem:[%s1220 + $0x2c] sm:$0xf]
  %v1233 = vld [vmem:[%s1220 + $0x30] sm:$0xf]
  %v1234 = vld [vmem:[%s1220 + $0x34] sm:$0xf]
  %v1235 = vld [vmem:[%s1220 + $0x38] sm:$0xf]
  %v1236 = vld [vmem:[%s1220 + $0x3c] sm:$0xf]
  %v1253 = vunpack.c.l.b16 %v1221
  %v1254 = vunpack.c.l.b16 %v1222
  %v1255 = vunpack.c.l.b16 %v1223
  %v1256 = vunpack.c.l.b16 %v1224
  %v1257 = vunpack.c.l.b16 %v1225
  %v1258 = vunpack.c.l.b16 %v1226
  %v1259 = vunpack.c.l.b16 %v1227
  %v1260 = vunpack.c.l.b16 %v1228
  %v1261 = vunpack.c.l.b16 %v1229
  %v1262 = vunpack.c.l.b16 %v1230
  %v1263 = vunpack.c.l.b16 %v1231
  %v1264 = vunpack.c.l.b16 %v1232
  %v1265 = vunpack.c.l.b16 %v1233
  %v1266 = vunpack.c.l.b16 %v1234
  %v1267 = vunpack.c.l.b16 %v1235
  %v1268 = vunpack.c.l.b16 %v1236
  %v1269 = vpack.c.b16 %v1254, %v1253
  %v1270 = vpack.c.b16 %v1256, %v1255
  %v1271 = vpack.c.b16 %v1258, %v1257
  %v1272 = vpack.c.b16 %v1260, %v1259
  %v1273 = vpack.c.b16 %v1262, %v1261
  %v1274 = vpack.c.b16 %v1264, %v1263
  %v1275 = vpack.c.b16 %v1266, %v1265
  %v1276 = vpack.c.b16 %v1268, %v1267
  %1285 = vmatprep.subr.bf16.mxu0 0
  %1286 = vmatpush1.bf16.msra.mxu0 %v1269
  %1287 = vmatprep.subr.bf16.mxu0 0
  %1288 = vmatpush1.bf16.msra.mxu0 %v1270
  %1289 = vmatprep.subr.bf16.mxu0 0
  %1290 = vmatpush1.bf16.msra.mxu0 %v1271
  %1291 = vmatprep.subr.bf16.mxu0 0
  %1292 = vmatpush1.bf16.msra.mxu0 %v1272
  %1293 = vmatprep.subr.bf16.mxu0 0
  %1294 = vmatpush1.bf16.msra.mxu0 %v1273
  %1295 = vmatprep.subr.bf16.mxu0 0
  %1296 = vmatpush1.bf16.msra.mxu0 %v1274
  %1297 = vmatprep.subr.bf16.mxu0 0
  %1298 = vmatpush1.bf16.msra.mxu0 %v1275
  %1299 = vmatprep.subr.bf16.mxu0 0
  %1300 = vmatpush1.bf16.msra.mxu0 %v1276
  %1301 = vmatprep.subr.bf16.mxu0 0
  %1302 = vmatpush1.bf16.msra.mxu0 0
  %1303 = vmatprep.subr.bf16.mxu0 0
  %1304 = vmatpush1.bf16.msra.mxu0 0
  %1305 = vmatprep.subr.bf16.mxu0 0
  %1306 = vmatpush1.bf16.msra.mxu0 0
  %1307 = vmatprep.subr.bf16.mxu0 0
  %1308 = vmatpush1.bf16.msra.mxu0 0
  %1309 = vmatprep.subr.bf16.mxu0 0
  %1310 = vmatpush1.bf16.msra.mxu0 0
  %1311 = vmatprep.subr.bf16.mxu0 0
  %1312 = vmatpush1.bf16.msra.mxu0 0
  %1313 = vmatprep.subr.bf16.mxu0 0
  %1314 = vmatpush1.bf16.msra.mxu0 0
  %1315 = vmatprep.subr.bf16.mxu0 0
  %1316 = vmatpush1.bf16.msra.mxu0 0
  %1317 = vmatprep.mubr.bf16.mxu0 0
  %1318 = vmatmul.mubr.bf16.gmra.mrb[0].mxu0 %v989
  %v1319 = vpop.f32.mrb[0].mxu0
  %v1320 = vadd.f32 0.0, %v1319
  %v1321 = vpop.f32.mrb[0].mxu0
  %v1322 = vpop.f32.mrb[0].mxu0
  %v1323 = vadd.f32 0.0, %v1322
  %v1324 = vpop.f32.mrb[0].mxu0
  %1325 = vmatprep.mubr.bf16.mxu0 0
  %1326 = vmatmul.mubr.bf16.gmra.mrb[0].mxu0 %v990
  %v1327 = vpop.f32.mrb[0].mxu0
  %v1328 = vadd.f32 0.0, %v1327
  %v1329 = vpop.f32.mrb[0].mxu0
  %v1330 = vpop.f32.mrb[0].mxu0
  %v1331 = vadd.f32 0.0, %v1330
  %v1332 = vpop.f32.mrb[0].mxu0
  %1333 = vmatprep.mubr.bf16.mxu0 0
  %1334 = vmatmul.mubr.bf16.gmra.mrb[0].mxu0 %v991
  %v1335 = vpop.f32.mrb[0].mxu0
  %v1336 = vadd.f32 0.0, %v1335
  %v1337 = vpop.f32.mrb[0].mxu0
  %v1338 = vpop.f32.mrb[0].mxu0
  %v1339 = vpop.f32.mrb[0].mxu0
  %1340 = vdwg.mxu0
  %v1346 = vrot.slane %v1199, 1
  %v1347 = vrot.slane %v1202, 1
  %v1348 = vsel %vm811, %v1346, %v1347
  %v1349 = vrot.slane %v1207, 1
  %v1350 = vsel %vm811, %v1347, %v1349
  %v1351 = vrot.slane %v1210, 1
  %v1352 = vsel %vm811, %v1349, %v1351
  %v1353 = vrot.slane %v1215, 1
  %v1354 = vsel %vm811, %v1351, %v1353
  %v1360 = vadd.f32 %v1078, %v1348
  %v1361 = vadd.f32 %v1081, %v1350
  %v1362 = vadd.f32 %v1086, %v1352
  %v1363 = vadd.f32 %v1089, %v1354
  %v1364 = vadd.f32 %v1094, %v1353
  %v1370 = vrot.slane %v1320, 2
  %v1371 = vrot.slane %v1323, 2
  %v1372 = vsel %vm836, %v1370, %v1371
  %v1373 = vrot.slane %v1328, 2
  %v1374 = vsel %vm836, %v1371, %v1373
  %v1375 = vrot.slane %v1331, 2
  %v1376 = vsel %vm836, %v1373, %v1375
  %v1377 = vrot.slane %v1336, 2
  %v1378 = vsel %vm836, %v1375, %v1377
  %v1384 = vadd.f32 %v1360, %v1372
  %v1385 = vadd.f32 %v1361, %v1374
  %v1386 = vadd.f32 %v1362, %v1376
  %v1387 = vadd.f32 %v1363, %v1378
  %v1388 = vadd.f32 %v1364, %v1377
  %v1389 = vld [vmem:[%s6] sm:$0x1]
  %v1391 = vlaneseq
  %v1392 = vshrl.u32 %v1391, 7
  %v1393 = vsub.s32 0, %v1392
  %v1394 = vrot.slane %v1389, %v1393
  %v1396 = vadd.f32 %v1384, %v1394
  %v1397 = vadd.f32 %v1385, %v1394
  %v1398 = vmax.f32 %v1396, 0.0
  %v1399 = vmax.f32 %v1397, 0.0
  %1400 = vst [vmem:[%s7] sm:$0xff] %v1398
  %1401 = vst [vmem:[%s7 + $0x8] sm:$0xff] %v1399
  %v1402 = vld [vmem:[%s6] sm:$0x1]
  %v1404 = vlaneseq
  %v1405 = vshrl.u32 %v1404, 7
  %v1406 = vsub.s32 0, %v1405
  %v1407 = vrot.slane %v1402, %v1406
  %v1409 = vadd.f32 %v1386, %v1407
  %v1410 = vadd.f32 %v1387, %v1407
  %v1411 = vadd.f32 %v1388, %v1407
  %v1412 = vmax.f32 %v1409, 0.0
  %v1413 = vmax.f32 %v1410, 0.0
  %v1414 = vmax.f32 %v1411, 0.0
  %s1415 = scalar_lea.vmem %s7, 16
  %1416 = vst [vmem:[%s1415 - $0x2] sm:$0xfc] %v1412
  %1417 = vst [vmem:[%s1415 + $0x6] sm:$0xff] %v1413
  %1418 = vst [vmem:[%s1415 + $0xe] sm:$0x3] %v1414
  // Predicated region
  $region30: #{_unet_up_forward_nchw.1} parent=0 // pred_check
    _
  $region31: #{_unet_up_forward_nchw.1} parent=0 // pred_check_branch
    %1420 = sbr.rel (0) target = $region33
  $region32: #{_unet_up_forward_nchw.1} parent=0 // pred_region
    _
  $region33: #{_unet_up_forward_nchw.1} parent=0 // pred_fallthru
    _
  // Predicated region
  $region34: #{_unet_up_forward_nchw.1} parent=0 // pred_check
    _
  $region35: #{_unet_up_forward_nchw.1} parent=0 // pred_check_branch
    %1422 = sbr.rel (0) target = $region37
  $region36: #{_unet_up_forward_nchw.1} parent=0 // pred_region
    _
  $region37: #{_unet_up_forward_nchw.1} parent=0 // pred_fallthru
    _

</llo_original>
